<compile_context>
chip_gen: v7x
topology: tpu7x:2x2x1
jax: 0.10.0
libtpu: 0.0.40
codegen_flags: <defaults>
</compile_context>

<pallas_src>
import functools

import numpy as np
import jax
import jax.numpy as jnp
from jax.experimental import pallas as pl
from jax.experimental.pallas import tpu as pltpu

# ----------------------------- static configuration ------------------------ #
TB_MAX = 128     # max images per grid step (batch tile); multiple of 8
C1PAD = 16       # conv1 output channels padded (H1=10 -> 16)
C2PAD = 32       # conv2 output channels padded (H2=20 -> 32); 4*C2PAD = 128
W1L = 12 * C1PAD       # conv1/pool1 lane width  (192)
W2L = 4 * C2PAD        # conv2/pool2 lane width  (128)
FCPAD = 128      # fc hidden / logit lane padding
KS = 5           # conv kernel size
FC_HIDDEN = 50   # fc1 output features (from the module spec)
# Input spatial size is forced to 28x28 by fc1.in_features = 320 = H2*4*4.


# ------------------------------- fused kernel ------------------------------ #
def net_kernel(xg_ref, t1_ref, bb1_ref, t2_ref, bb2_ref,
               fw1_ref, fb1_ref, fw2_ref, fb2_ref, o_ref, p1_ref,
               *, tb, class_count):
    f32 = jnp.float32
    bf16 = jnp.bfloat16

    # xg rows: m*(6*tb) + g*tb + b   with m = 2*rho + a (H pool member),
    #          g = pool1 row group;  lanes: kh*28*D + w*D + ci  (im2col over H).
    xg = xg_ref[0]                        # (24*tb, 5*28*D) bf16
    bb1 = bb1_ref[...]                    # (1, 192) f32
    bb2 = bb2_ref[...]                    # (1, 128) f32

    # ---------------- conv1 + 2x2 maxpool + relu --------------------------- #
    # Two big MXU dots: kh folded into K, all 4 H pool members stacked in M.
    r0 = jnp.dot(xg, t1_ref[0], preferred_element_type=f32)    # (24*tb, 192)
    r1 = jnp.dot(xg, t1_ref[1], preferred_element_type=f32)
    full = jnp.maximum(r0, r1)            # max over pool-column member c
    B6 = 6 * tb
    for rho in range(2):
        blk = jnp.maximum(full[(2 * rho) * B6:(2 * rho + 1) * B6, :],
                          full[(2 * rho + 1) * B6:(2 * rho + 2) * B6, :])
        # pool1_par[rho] rows = (g, b) for ph = 2g+rho; lanes = (pw, channel)
        p1_ref[rho, :, :] = jnp.maximum(blk + bb1, 0.0).astype(bf16)

    # ---------------- conv2 + (dropout1) + 2x2 maxpool + relu -------------- #
    # TODO(synk): nn.Dropout2d(0.5) layers are inference-mode identity (no RNG).
    mx = None
    for a2 in range(2):
        acc = None
        for kh in range(KS):
            t = a2 + kh
            lhs = p1_ref[t % 2, (t // 2) * tb:(t // 2 + 4) * tb, :]  # (4*tb,192)
            part = jnp.dot(lhs, t2_ref[kh],
                           preferred_element_type=f32)               # (4*tb,256)
            acc = part if acc is None else acc + part
        m_a = jnp.maximum(acc[:, :W2L], acc[:, W2L:])     # max over c2 halves
        mx = m_a if mx is None else jnp.maximum(mx, m_a)  # max over a2
    # pool2 rows = (qh, b), lanes = (qw, conv2-channel)
    pool2 = jnp.maximum(mx + bb2, 0.0).astype(bf16)                  # (4*tb,128)

    # ---------------- fc1 + relu + (dropout2) + fc2 + log_softmax ---------- #
    h = None
    for qh in range(4):
        part = jnp.dot(pool2[qh * tb:(qh + 1) * tb, :], fw1_ref[qh],
                       preferred_element_type=f32)                   # (tb, 128)
        h = part if h is None else h + part
    h = jnp.maximum(h + fb1_ref[...], 0.0).astype(bf16)
    z = jnp.dot(h, fw2_ref[...], preferred_element_type=f32) + fb2_ref[...]

    # mask padded logit lanes so they cannot contaminate the softmax reduction
    col = jax.lax.broadcasted_iota(jnp.int32, z.shape, 1)
    z = jnp.where(col < class_count, z, -1e30)
    m = jnp.max(z, axis=-1, keepdims=True)
    s = z - m
    denom = jnp.sum(jnp.exp(s), axis=-1, keepdims=True)  # masked lanes underflow to 0
    o_ref[...] = s - jnp.log(denom)


# --------------------- one-time host-side weight packing ------------------- #
def pack_params(params, D, H1, H2, class_count):
    """Repack torch-layout params into lane-padded, MXU-ready matrices."""
    w1, b1, w2, b2, fw1, fb1, fw2, fb2 = [np.asarray(p, np.float32) for p in params]
    K1 = KS * 28 * D

    # conv1 Toeplitz (kh folded into K): T1[c][kh*28*D + w*D + ci, pw*C1PAD + o]
    # = w1[o, ci, kh, kw] with w = 2*pw + c + kw  (conv output column j = 2pw+c).
    T1 = np.zeros((2, K1, W1L), np.float32)
    for c in range(2):
        for kh in range(KS):
            for pw in range(12):
                for kw in range(KS):
                    w = 2 * pw + c + kw
                    for ci in range(D):
                        T1[c, kh * 28 * D + w * D + ci,
                           pw * C1PAD:pw * C1PAD + H1] = w1[:, ci, kh, kw]
    BB1 = np.zeros((1, W1L), np.float32)
    for pw in range(12):
        BB1[0, pw * C1PAD:pw * C1PAD + H1] = b1

    # conv2 Toeplitz with both c2 pool-column members concatenated along N:
    # T2[kh][pw*C1PAD + c1, c2*W2L + qw*C2PAD + o2] = w2[o2, c1, kh, kw],
    # pw = 2*qw + c2 + kw.
    T2 = np.zeros((KS, W1L, 2 * W2L), np.float32)
    for kh in range(KS):
        for c2 in range(2):
            for qw in range(4):
                for kw in range(KS):
                    pw = 2 * qw + c2 + kw
                    for c1 in range(H1):
                        T2[kh, pw * C1PAD + c1,
                           c2 * W2L + qw * C2PAD:c2 * W2L + qw * C2PAD + H2] = \
                            w2[:, c1, kh, kw]
    BB2 = np.zeros((1, W2L), np.float32)
    for qw in range(4):
        BB2[0, qw * C2PAD:qw * C2PAD + H2] = b2

    # fc1: rows permuted so the kernel's (qh | qw,channel) layout reproduces
    # torch's NCHW flatten index  o2*16 + qh*4 + qw.
    FW1 = np.zeros((4, W2L, FCPAD), np.float32)
    for qh in range(4):
        for qw in range(4):
            for o2 in range(H2):
                FW1[qh, qw * C2PAD + o2, :FC_HIDDEN] = fw1[:, o2 * 16 + qh * 4 + qw]
    FB1 = np.zeros((1, FCPAD), np.float32)
    FB1[0, :FC_HIDDEN] = fb1

    FW2 = np.zeros((FCPAD, FCPAD), np.float32)
    FW2[:FC_HIDDEN, :class_count] = fw2.T
    FB2 = np.zeros((1, FCPAD), np.float32)
    FB2[0, :class_count] = fb2

    bf = jnp.bfloat16
    f32 = jnp.float32
    return (jnp.asarray(T1, bf), jnp.asarray(BB1, f32),
            jnp.asarray(T2, bf), jnp.asarray(BB2, f32),
            jnp.asarray(FW1, bf), jnp.asarray(FB1, f32),
            jnp.asarray(FW2, bf), jnp.asarray(FB2, f32))


# ------------------------------ forward wrapper ---------------------------- #
def net_forward(x_nchw, packed, class_count):
    T1, BB1, T2, BB2, FW1, FB1, FW2, FB2 = packed
    B, D = x_nchw.shape[0], x_nchw.shape[1]
    # Batch tile: as large as possible up to 128 (multiple of 8). For very large
    # fixed batches on v7x, pick TB so the grid length is >= 2 (both TCs busy).
    TB = min(TB_MAX, ((B + 7) // 8) * 8)
    ntiles = pl.cdiv(B, TB)
    B_pad = ntiles * TB

    # Single relayout pass: NCHW -> NHWC bf16, pad batch, im2col over H
    # (5 shifted rows per conv row), then regroup conv rows as (m, g).
    x = jnp.transpose(x_nchw, (0, 2, 3, 1)).astype(jnp.bfloat16)     # (B,28,28,D)
    x = jnp.pad(x, ((0, B_pad - B), (0, 0), (0, 0), (0, 0)))
    win = jnp.stack([x[:, kh:kh + 24] for kh in range(KS)], axis=2)  # (B,24,5,28,D)
    win = win.reshape(ntiles, TB, 6, 4, KS, 28, D)                   # h0 = 4g + m
    win = jnp.transpose(win, (0, 3, 2, 1, 4, 5, 6))                  # (t,m,g,b,kh,w,ci)
    xg = win.reshape(ntiles, 24 * TB, KS * 28 * D)                   # row = m*6TB+g*TB+b

    kern = functools.partial(net_kernel, tb=TB, class_count=class_count)
    out = pl.pallas_call(
        kern,
        out_shape=jax.ShapeDtypeStruct((B_pad, FCPAD), jnp.float32),
        grid=(ntiles,),
        in_specs=[
            pl.BlockSpec((1, 24 * TB, KS * 28 * D), lambda i: (i, 0, 0)),
            pl.BlockSpec(T1.shape, lambda i: (0, 0, 0)),
            pl.BlockSpec(BB1.shape, lambda i: (0, 0)),
            pl.BlockSpec(T2.shape, lambda i: (0, 0, 0)),
            pl.BlockSpec(BB2.shape, lambda i: (0, 0)),
            pl.BlockSpec(FW1.shape, lambda i: (0, 0, 0)),
            pl.BlockSpec(FB1.shape, lambda i: (0, 0)),
            pl.BlockSpec(FW2.shape, lambda i: (0, 0)),
            pl.BlockSpec(FB2.shape, lambda i: (0, 0)),
        ],
        out_specs=pl.BlockSpec((TB, FCPAD), lambda i: (i, 0)),
        scratch_shapes=[pltpu.VMEM((2, 6 * TB, W1L), jnp.bfloat16)],  # pool1 stage
        compiler_params=pltpu.CompilerParams(
            dimension_semantics=("parallel",),
            vmem_limit_bytes=32 * 1024 * 1024),
    )(xg, T1, BB1, T2, BB2, FW1, FB1, FW2, FB2)
    return out[:B, :class_count]


# -------------------------- pure-JAX reference (f32) ----------------------- #
def reference_forward(x, params):
    w1, b1, w2, b2, fw1, fb1, fw2, fb2 = params
    dn = ('NCHW', 'OIHW', 'NCHW')

    def pool(y):
        return jnp.maximum(jnp.maximum(y[:, :, 0::2, 0::2], y[:, :, 0::2, 1::2]),
                           jnp.maximum(y[:, :, 1::2, 0::2], y[:, :, 1::2, 1::2]))

    y = jax.lax.conv_general_dilated(x, w1, (1, 1), 'VALID', dimension_numbers=dn)
    y = jnp.maximum(pool(y + b1[None, :, None, None]), 0.0)
    y = jax.lax.conv_general_dilated(y, w2, (1, 1), 'VALID', dimension_numbers=dn)
    y = jnp.maximum(pool(y + b2[None, :, None, None]), 0.0)
    y = y.reshape(x.shape[0], -1)
    y = jnp.maximum(y @ fw1.T + fb1, 0.0)
    y = y @ fw2.T + fb2
    return jax.nn.log_softmax(y, axis=-1)


# ---------------------------------- driver --------------------------------- #
def init_params(key, D, H1, H2, class_count):
    ks = jax.random.split(key, 8)
    f32 = jnp.float32
    w1 = 0.1 * jax.random.normal(ks[0], (H1, D, KS, KS), f32)          # conv1 OIHW
    b1 = 0.1 * jax.random.normal(ks[1], (H1,), f32)
    w2 = 0.1 * jax.random.normal(ks[2], (H2, H1, KS, KS), f32)         # conv2 OIHW
    b2 = 0.1 * jax.random.normal(ks[3], (H2,), f32)
    fw1 = 0.1 * jax.random.normal(ks[4], (FC_HIDDEN, H2 * 16), f32)    # fc1 (out,in)
    fb1 = 0.1 * jax.random.normal(ks[5], (FC_HIDDEN,), f32)
    fw2 = 0.1 * jax.random.normal(ks[6], (class_count, FC_HIDDEN), f32)  # fc2 (out,in)
    fb2 = 0.1 * jax.random.normal(ks[7], (class_count,), f32)
    return (w1, b1, w2, b2, fw1, fb1, fw2, fb2)


if __name__ == "__main__":
    D, H1, H2, CLASSES = 1, 10, 20, 10
    B = 2   # 28x28 input is the only spatial size consistent with fc1's 320

    key = jax.random.PRNGKey(0)
    kx, kp = jax.random.split(key)
    x = jax.random.normal(kx, (B, D, 28, 28), jnp.float32)
    params = init_params(kp, D, H1, H2, CLASSES)
    packed = pack_params(params, D, H1, H2, CLASSES)    # once, outside jit

    fwd = jax.jit(net_forward, static_argnums=(2,))
    out = jax.block_until_ready(fwd(x, packed, CLASSES))

    ref = jax.block_until_ready(jax.jit(reference_forward)(x, params))

    assert out.shape == (B, CLASSES)
    assert bool(jnp.all(jnp.isfinite(out)))
    err = float(jnp.max(jnp.abs(out - ref)))
    assert err < 2.5e-1, f"mismatch vs f32 reference: max abs err = {err}"
    print("KERNEL_OK")
</pallas_src>

<mosaic_0001>
module attributes {stable_mosaic.version = 11 : i64} {
  func.func @net_kernel(%arg0: i32, %arg1: memref<1x192x140xbf16, #tpu.memory_space<vmem>>, %arg2: memref<2x140x192xbf16, #tpu.memory_space<vmem>>, %arg3: memref<1x192xf32, #tpu.memory_space<vmem>>, %arg4: memref<5x192x256xbf16, #tpu.memory_space<vmem>>, %arg5: memref<1x128xf32, #tpu.memory_space<vmem>>, %arg6: memref<4x128x128xbf16, #tpu.memory_space<vmem>>, %arg7: memref<1x128xf32, #tpu.memory_space<vmem>>, %arg8: memref<128x128xbf16, #tpu.memory_space<vmem>>, %arg9: memref<1x128xf32, #tpu.memory_space<vmem>>, %arg10: memref<8x128xf32, #tpu.memory_space<vmem>>, %arg11: memref<2x48x192xbf16, #tpu.memory_space<vmem>>) attributes {dimension_semantics = [#tpu.dimension_semantics<parallel>], iteration_bounds = array<i64: 1>, scalar_prefetch = 0 : i64, scratch_operands = 1 : i64, tpu.core_type = #tpu.core_type<tc>, window_params = [{transform_indices = @transform_0, window_bounds = array<i64: 1, 192, 140>}, {pipeline_mode = #tpu.pipeline_mode<synchronous>, transform_indices = @transform_1, window_bounds = array<i64: 2, 140, 192>}, {pipeline_mode = #tpu.pipeline_mode<synchronous>, transform_indices = @transform_2, window_bounds = array<i64: 1, 192>}, {pipeline_mode = #tpu.pipeline_mode<synchronous>, transform_indices = @transform_3, window_bounds = array<i64: 5, 192, 256>}, {pipeline_mode = #tpu.pipeline_mode<synchronous>, transform_indices = @transform_4, window_bounds = array<i64: 1, 128>}, {pipeline_mode = #tpu.pipeline_mode<synchronous>, transform_indices = @transform_5, window_bounds = array<i64: 4, 128, 128>}, {pipeline_mode = #tpu.pipeline_mode<synchronous>, transform_indices = @transform_6, window_bounds = array<i64: 1, 128>}, {pipeline_mode = #tpu.pipeline_mode<synchronous>, transform_indices = @transform_7, window_bounds = array<i64: 128, 128>}, {pipeline_mode = #tpu.pipeline_mode<synchronous>, transform_indices = @transform_8, window_bounds = array<i64: 1, 128>}, {transform_indices = @transform_9, window_bounds = array<i64: 8, 128>}]} {
    %c0 = arith.constant 0 : index
    %c0_0 = arith.constant 0 : index
    %c0_1 = arith.constant 0 : index
    %0 = vector.load %arg1[%c0, %c0_0, %c0_1] : memref<1x192x140xbf16, #tpu.memory_space<vmem>>, vector<1x192x140xbf16>
    %1 = vector.shape_cast %0 : vector<1x192x140xbf16> to vector<192x140xbf16>
    %c0_2 = arith.constant 0 : index
    %c0_3 = arith.constant 0 : index
    %2 = vector.load %arg3[%c0_2, %c0_3] : memref<1x192xf32, #tpu.memory_space<vmem>>, vector<1x192xf32>
    %c0_4 = arith.constant 0 : index
    %c0_5 = arith.constant 0 : index
    %3 = vector.load %arg5[%c0_4, %c0_5] : memref<1x128xf32, #tpu.memory_space<vmem>>, vector<1x128xf32>
    %c0_6 = arith.constant 0 : index
    %c0_7 = arith.constant 0 : index
    %c0_8 = arith.constant 0 : index
    %4 = vector.load %arg2[%c0_6, %c0_7, %c0_8] : memref<2x140x192xbf16, #tpu.memory_space<vmem>>, vector<1x140x192xbf16>
    %5 = vector.shape_cast %4 : vector<1x140x192xbf16> to vector<140x192xbf16>
    %cst = arith.constant dense<0.000000e+00> : vector<192x192xf32>
    %6 = tpu.matmul %1, %5, %cst {dimension_numbers = #tpu.dot_dimension_numbers<[1], [0], [0], [1], [0, 0, 1, 1], [], []>} : vector<192x140xbf16>, vector<140x192xbf16>, vector<192x192xf32> -> vector<192x192xf32>
    %c1 = arith.constant 1 : index
    %c0_9 = arith.constant 0 : index
    %c0_10 = arith.constant 0 : index
    %7 = vector.load %arg2[%c1, %c0_9, %c0_10] : memref<2x140x192xbf16, #tpu.memory_space<vmem>>, vector<1x140x192xbf16>
    %8 = vector.shape_cast %7 : vector<1x140x192xbf16> to vector<140x192xbf16>
    %cst_11 = arith.constant dense<0.000000e+00> : vector<192x192xf32>
    %9 = tpu.matmul %1, %8, %cst_11 {dimension_numbers = #tpu.dot_dimension_numbers<[1], [0], [0], [1], [0, 0, 1, 1], [], []>} : vector<192x140xbf16>, vector<140x192xbf16>, vector<192x192xf32> -> vector<192x192xf32>
    %10 = arith.maximumf %6, %9 : vector<192x192xf32>
    %11 = vector.extract_strided_slice %10 {offsets = [0, 0], sizes = [48, 192], strides = [1, 1]} : vector<192x192xf32> to vector<48x192xf32>
    %12 = vector.extract_strided_slice %10 {offsets = [48, 0], sizes = [48, 192], strides = [1, 1]} : vector<192x192xf32> to vector<48x192xf32>
    %13 = arith.maximumf %11, %12 : vector<48x192xf32>
    %14 = vector.broadcast %2 : vector<1x192xf32> to vector<48x192xf32>
    %15 = arith.addf %13, %14 : vector<48x192xf32>
    %cst_12 = arith.constant 0.000000e+00 : f32
    %16 = vector.broadcast %cst_12 : f32 to vector<48x192xf32>
    %17 = arith.maximumf %15, %16 : vector<48x192xf32>
    %18 = arith.truncf %17 : vector<48x192xf32> to vector<48x192xbf16>
    %c0_13 = arith.constant 0 : index
    %c0_14 = arith.constant 0 : index
    %c0_15 = arith.constant 0 : index
    %19 = vector.load %arg11[%c0_13, %c0_14, %c0_15] : memref<2x48x192xbf16, #tpu.memory_space<vmem>>, vector<1x48x192xbf16>
    %20 = vector.shape_cast %19 : vector<1x48x192xbf16> to vector<48x192xbf16>
    %21 = vector.shape_cast %18 : vector<48x192xbf16> to vector<1x48x192xbf16>
    tpu.vector_store %arg11[%c0_13, %c0_14, %c0_15], %21 {strides = array<i32>} : memref<2x48x192xbf16, #tpu.memory_space<vmem>>, vector<1x48x192xbf16>,
    %22 = vector.extract_strided_slice %10 {offsets = [96, 0], sizes = [48, 192], strides = [1, 1]} : vector<192x192xf32> to vector<48x192xf32>
    %23 = vector.extract_strided_slice %10 {offsets = [144, 0], sizes = [48, 192], strides = [1, 1]} : vector<192x192xf32> to vector<48x192xf32>
    %24 = arith.maximumf %22, %23 : vector<48x192xf32>
    %25 = vector.broadcast %2 : vector<1x192xf32> to vector<48x192xf32>
    %26 = arith.addf %24, %25 : vector<48x192xf32>
    %cst_16 = arith.constant 0.000000e+00 : f32
    %27 = vector.broadcast %cst_16 : f32 to vector<48x192xf32>
    %28 = arith.maximumf %26, %27 : vector<48x192xf32>
    %29 = arith.truncf %28 : vector<48x192xf32> to vector<48x192xbf16>
    %c1_17 = arith.constant 1 : index
    %c0_18 = arith.constant 0 : index
    %c0_19 = arith.constant 0 : index
    %30 = vector.load %arg11[%c1_17, %c0_18, %c0_19] : memref<2x48x192xbf16, #tpu.memory_space<vmem>>, vector<1x48x192xbf16>
    %31 = vector.shape_cast %30 : vector<1x48x192xbf16> to vector<48x192xbf16>
    %32 = vector.shape_cast %29 : vector<48x192xbf16> to vector<1x48x192xbf16>
    tpu.vector_store %arg11[%c1_17, %c0_18, %c0_19], %32 {strides = array<i32>} : memref<2x48x192xbf16, #tpu.memory_space<vmem>>, vector<1x48x192xbf16>,
    %c0_20 = arith.constant 0 : index
    %c0_21 = arith.constant 0 : index
    %c0_22 = arith.constant 0 : index
    %33 = vector.load %arg11[%c0_20, %c0_21, %c0_22] : memref<2x48x192xbf16, #tpu.memory_space<vmem>>, vector<1x32x192xbf16>
    %34 = vector.shape_cast %33 : vector<1x32x192xbf16> to vector<32x192xbf16>
    %c0_23 = arith.constant 0 : index
    %c0_24 = arith.constant 0 : index
    %c0_25 = arith.constant 0 : index
    %35 = vector.load %arg4[%c0_23, %c0_24, %c0_25] : memref<5x192x256xbf16, #tpu.memory_space<vmem>>, vector<1x192x256xbf16>
    %36 = vector.shape_cast %35 : vector<1x192x256xbf16> to vector<192x256xbf16>
    %cst_26 = arith.constant dense<0.000000e+00> : vector<32x256xf32>
    %37 = tpu.matmul %34, %36, %cst_26 {dimension_numbers = #tpu.dot_dimension_numbers<[1], [0], [0], [1], [0, 0, 1, 1], [], []>} : vector<32x192xbf16>, vector<192x256xbf16>, vector<32x256xf32> -> vector<32x256xf32>
    %c1_27 = arith.constant 1 : index
    %c0_28 = arith.constant 0 : index
    %c0_29 = arith.constant 0 : index
    %38 = vector.load %arg11[%c1_27, %c0_28, %c0_29] : memref<2x48x192xbf16, #tpu.memory_space<vmem>>, vector<1x32x192xbf16>
    %39 = vector.shape_cast %38 : vector<1x32x192xbf16> to vector<32x192xbf16>
    %c1_30 = arith.constant 1 : index
    %c0_31 = arith.constant 0 : index
    %c0_32 = arith.constant 0 : index
    %40 = vector.load %arg4[%c1_30, %c0_31, %c0_32] : memref<5x192x256xbf16, #tpu.memory_space<vmem>>, vector<1x192x256xbf16>
    %41 = vector.shape_cast %40 : vector<1x192x256xbf16> to vector<192x256xbf16>
    %cst_33 = arith.constant dense<0.000000e+00> : vector<32x256xf32>
    %42 = tpu.matmul %39, %41, %cst_33 {dimension_numbers = #tpu.dot_dimension_numbers<[1], [0], [0], [1], [0, 0, 1, 1], [], []>} : vector<32x192xbf16>, vector<192x256xbf16>, vector<32x256xf32> -> vector<32x256xf32>
    %43 = arith.addf %37, %42 : vector<32x256xf32>
    %c0_34 = arith.constant 0 : index
    %c8 = arith.constant 8 : index
    %c0_35 = arith.constant 0 : index
    %44 = vector.load %arg11[%c0_34, %c8, %c0_35] : memref<2x48x192xbf16, #tpu.memory_space<vmem>>, vector<1x32x192xbf16>
    %45 = vector.shape_cast %44 : vector<1x32x192xbf16> to vector<32x192xbf16>
    %c2 = arith.constant 2 : index
    %c0_36 = arith.constant 0 : index
    %c0_37 = arith.constant 0 : index
    %46 = vector.load %arg4[%c2, %c0_36, %c0_37] : memref<5x192x256xbf16, #tpu.memory_space<vmem>>, vector<1x192x256xbf16>
    %47 = vector.shape_cast %46 : vector<1x192x256xbf16> to vector<192x256xbf16>
    %cst_38 = arith.constant dense<0.000000e+00> : vector<32x256xf32>
    %48 = tpu.matmul %45, %47, %cst_38 {dimension_numbers = #tpu.dot_dimension_numbers<[1], [0], [0], [1], [0, 0, 1, 1], [], []>} : vector<32x192xbf16>, vector<192x256xbf16>, vector<32x256xf32> -> vector<32x256xf32>
    %49 = arith.addf %43, %48 : vector<32x256xf32>
    %c1_39 = arith.constant 1 : index
    %c8_40 = arith.constant 8 : index
    %c0_41 = arith.constant 0 : index
    %50 = vector.load %arg11[%c1_39, %c8_40, %c0_41] : memref<2x48x192xbf16, #tpu.memory_space<vmem>>, vector<1x32x192xbf16>
    %51 = vector.shape_cast %50 : vector<1x32x192xbf16> to vector<32x192xbf16>
    %c3 = arith.constant 3 : index
    %c0_42 = arith.constant 0 : index
    %c0_43 = arith.constant 0 : index
    %52 = vector.load %arg4[%c3, %c0_42, %c0_43] : memref<5x192x256xbf16, #tpu.memory_space<vmem>>, vector<1x192x256xbf16>
    %53 = vector.shape_cast %52 : vector<1x192x256xbf16> to vector<192x256xbf16>
    %cst_44 = arith.constant dense<0.000000e+00> : vector<32x256xf32>
    %54 = tpu.matmul %51, %53, %cst_44 {dimension_numbers = #tpu.dot_dimension_numbers<[1], [0], [0], [1], [0, 0, 1, 1], [], []>} : vector<32x192xbf16>, vector<192x256xbf16>, vector<32x256xf32> -> vector<32x256xf32>
    %55 = arith.addf %49, %54 : vector<32x256xf32>
    %c0_45 = arith.constant 0 : index
    %c16 = arith.constant 16 : index
    %c0_46 = arith.constant 0 : index
    %56 = vector.load %arg11[%c0_45, %c16, %c0_46] : memref<2x48x192xbf16, #tpu.memory_space<vmem>>, vector<1x32x192xbf16>
    %57 = vector.shape_cast %56 : vector<1x32x192xbf16> to vector<32x192xbf16>
    %c4 = arith.constant 4 : index
    %c0_47 = arith.constant 0 : index
    %c0_48 = arith.constant 0 : index
    %58 = vector.load %arg4[%c4, %c0_47, %c0_48] : memref<5x192x256xbf16, #tpu.memory_space<vmem>>, vector<1x192x256xbf16>
    %59 = vector.shape_cast %58 : vector<1x192x256xbf16> to vector<192x256xbf16>
    %cst_49 = arith.constant dense<0.000000e+00> : vector<32x256xf32>
    %60 = tpu.matmul %57, %59, %cst_49 {dimension_numbers = #tpu.dot_dimension_numbers<[1], [0], [0], [1], [0, 0, 1, 1], [], []>} : vector<32x192xbf16>, vector<192x256xbf16>, vector<32x256xf32> -> vector<32x256xf32>
    %61 = arith.addf %55, %60 : vector<32x256xf32>
    %62 = vector.extract_strided_slice %61 {offsets = [0, 0], sizes = [32, 128], strides = [1, 1]} : vector<32x256xf32> to vector<32x128xf32>
    %63 = vector.extract_strided_slice %61 {offsets = [0, 128], sizes = [32, 128], strides = [1, 1]} : vector<32x256xf32> to vector<32x128xf32>
    %64 = arith.maximumf %62, %63 : vector<32x128xf32>
    %c1_50 = arith.constant 1 : index
    %c0_51 = arith.constant 0 : index
    %c0_52 = arith.constant 0 : index
    %65 = vector.load %arg11[%c1_50, %c0_51, %c0_52] : memref<2x48x192xbf16, #tpu.memory_space<vmem>>, vector<1x32x192xbf16>
    %66 = vector.shape_cast %65 : vector<1x32x192xbf16> to vector<32x192xbf16>
    %c0_53 = arith.constant 0 : index
    %c0_54 = arith.constant 0 : index
    %c0_55 = arith.constant 0 : index
    %67 = vector.load %arg4[%c0_53, %c0_54, %c0_55] : memref<5x192x256xbf16, #tpu.memory_space<vmem>>, vector<1x192x256xbf16>
    %68 = vector.shape_cast %67 : vector<1x192x256xbf16> to vector<192x256xbf16>
    %cst_56 = arith.constant dense<0.000000e+00> : vector<32x256xf32>
    %69 = tpu.matmul %66, %68, %cst_56 {dimension_numbers = #tpu.dot_dimension_numbers<[1], [0], [0], [1], [0, 0, 1, 1], [], []>} : vector<32x192xbf16>, vector<192x256xbf16>, vector<32x256xf32> -> vector<32x256xf32>
    %c0_57 = arith.constant 0 : index
    %c8_58 = arith.constant 8 : index
    %c0_59 = arith.constant 0 : index
    %70 = vector.load %arg11[%c0_57, %c8_58, %c0_59] : memref<2x48x192xbf16, #tpu.memory_space<vmem>>, vector<1x32x192xbf16>
    %71 = vector.shape_cast %70 : vector<1x32x192xbf16> to vector<32x192xbf16>
    %c1_60 = arith.constant 1 : index
    %c0_61 = arith.constant 0 : index
    %c0_62 = arith.constant 0 : index
    %72 = vector.load %arg4[%c1_60, %c0_61, %c0_62] : memref<5x192x256xbf16, #tpu.memory_space<vmem>>, vector<1x192x256xbf16>
    %73 = vector.shape_cast %72 : vector<1x192x256xbf16> to vector<192x256xbf16>
    %cst_63 = arith.constant dense<0.000000e+00> : vector<32x256xf32>
    %74 = tpu.matmul %71, %73, %cst_63 {dimension_numbers = #tpu.dot_dimension_numbers<[1], [0], [0], [1], [0, 0, 1, 1], [], []>} : vector<32x192xbf16>, vector<192x256xbf16>, vector<32x256xf32> -> vector<32x256xf32>
    %75 = arith.addf %69, %74 : vector<32x256xf32>
    %c1_64 = arith.constant 1 : index
    %c8_65 = arith.constant 8 : index
    %c0_66 = arith.constant 0 : index
    %76 = vector.load %arg11[%c1_64, %c8_65, %c0_66] : memref<2x48x192xbf16, #tpu.memory_space<vmem>>, vector<1x32x192xbf16>
    %77 = vector.shape_cast %76 : vector<1x32x192xbf16> to vector<32x192xbf16>
    %c2_67 = arith.constant 2 : index
    %c0_68 = arith.constant 0 : index
    %c0_69 = arith.constant 0 : index
    %78 = vector.load %arg4[%c2_67, %c0_68, %c0_69] : memref<5x192x256xbf16, #tpu.memory_space<vmem>>, vector<1x192x256xbf16>
    %79 = vector.shape_cast %78 : vector<1x192x256xbf16> to vector<192x256xbf16>
    %cst_70 = arith.constant dense<0.000000e+00> : vector<32x256xf32>
    %80 = tpu.matmul %77, %79, %cst_70 {dimension_numbers = #tpu.dot_dimension_numbers<[1], [0], [0], [1], [0, 0, 1, 1], [], []>} : vector<32x192xbf16>, vector<192x256xbf16>, vector<32x256xf32> -> vector<32x256xf32>
    %81 = arith.addf %75, %80 : vector<32x256xf32>
    %c0_71 = arith.constant 0 : index
    %c16_72 = arith.constant 16 : index
    %c0_73 = arith.constant 0 : index
    %82 = vector.load %arg11[%c0_71, %c16_72, %c0_73] : memref<2x48x192xbf16, #tpu.memory_space<vmem>>, vector<1x32x192xbf16>
    %83 = vector.shape_cast %82 : vector<1x32x192xbf16> to vector<32x192xbf16>
    %c3_74 = arith.constant 3 : index
    %c0_75 = arith.constant 0 : index
    %c0_76 = arith.constant 0 : index
    %84 = vector.load %arg4[%c3_74, %c0_75, %c0_76] : memref<5x192x256xbf16, #tpu.memory_space<vmem>>, vector<1x192x256xbf16>
    %85 = vector.shape_cast %84 : vector<1x192x256xbf16> to vector<192x256xbf16>
    %cst_77 = arith.constant dense<0.000000e+00> : vector<32x256xf32>
    %86 = tpu.matmul %83, %85, %cst_77 {dimension_numbers = #tpu.dot_dimension_numbers<[1], [0], [0], [1], [0, 0, 1, 1], [], []>} : vector<32x192xbf16>, vector<192x256xbf16>, vector<32x256xf32> -> vector<32x256xf32>
    %87 = arith.addf %81, %86 : vector<32x256xf32>
    %c1_78 = arith.constant 1 : index
    %c16_79 = arith.constant 16 : index
    %c0_80 = arith.constant 0 : index
    %88 = vector.load %arg11[%c1_78, %c16_79, %c0_80] : memref<2x48x192xbf16, #tpu.memory_space<vmem>>, vector<1x32x192xbf16>
    %89 = vector.shape_cast %88 : vector<1x32x192xbf16> to vector<32x192xbf16>
    %c4_81 = arith.constant 4 : index
    %c0_82 = arith.constant 0 : index
    %c0_83 = arith.constant 0 : index
    %90 = vector.load %arg4[%c4_81, %c0_82, %c0_83] : memref<5x192x256xbf16, #tpu.memory_space<vmem>>, vector<1x192x256xbf16>
    %91 = vector.shape_cast %90 : vector<1x192x256xbf16> to vector<192x256xbf16>
    %cst_84 = arith.constant dense<0.000000e+00> : vector<32x256xf32>
    %92 = tpu.matmul %89, %91, %cst_84 {dimension_numbers = #tpu.dot_dimension_numbers<[1], [0], [0], [1], [0, 0, 1, 1], [], []>} : vector<32x192xbf16>, vector<192x256xbf16>, vector<32x256xf32> -> vector<32x256xf32>
    %93 = arith.addf %87, %92 : vector<32x256xf32>
    %94 = vector.extract_strided_slice %93 {offsets = [0, 0], sizes = [32, 128], strides = [1, 1]} : vector<32x256xf32> to vector<32x128xf32>
    %95 = vector.extract_strided_slice %93 {offsets = [0, 128], sizes = [32, 128], strides = [1, 1]} : vector<32x256xf32> to vector<32x128xf32>
    %96 = arith.maximumf %94, %95 : vector<32x128xf32>
    %97 = arith.maximumf %64, %96 : vector<32x128xf32>
    %98 = vector.broadcast %3 : vector<1x128xf32> to vector<32x128xf32>
    %99 = arith.addf %97, %98 : vector<32x128xf32>
    %cst_85 = arith.constant 0.000000e+00 : f32
    %100 = vector.broadcast %cst_85 : f32 to vector<32x128xf32>
    %101 = arith.maximumf %99, %100 : vector<32x128xf32>
    %102 = arith.truncf %101 : vector<32x128xf32> to vector<32x128xbf16>
    %103 = vector.extract_strided_slice %102 {offsets = [0, 0], sizes = [8, 128], strides = [1, 1]} : vector<32x128xbf16> to vector<8x128xbf16>
    %c0_86 = arith.constant 0 : index
    %c0_87 = arith.constant 0 : index
    %c0_88 = arith.constant 0 : index
    %104 = vector.load %arg6[%c0_86, %c0_87, %c0_88] : memref<4x128x128xbf16, #tpu.memory_space<vmem>>, vector<1x128x128xbf16>
    %105 = vector.shape_cast %104 : vector<1x128x128xbf16> to vector<128x128xbf16>
    %cst_89 = arith.constant dense<0.000000e+00> : vector<8x128xf32>
    %106 = tpu.matmul %103, %105, %cst_89 {dimension_numbers = #tpu.dot_dimension_numbers<[1], [0], [0], [1], [0, 0, 1, 1], [], []>} : vector<8x128xbf16>, vector<128x128xbf16>, vector<8x128xf32> -> vector<8x128xf32>
    %107 = vector.extract_strided_slice %102 {offsets = [8, 0], sizes = [8, 128], strides = [1, 1]} : vector<32x128xbf16> to vector<8x128xbf16>
    %c1_90 = arith.constant 1 : index
    %c0_91 = arith.constant 0 : index
    %c0_92 = arith.constant 0 : index
    %108 = vector.load %arg6[%c1_90, %c0_91, %c0_92] : memref<4x128x128xbf16, #tpu.memory_space<vmem>>, vector<1x128x128xbf16>
    %109 = vector.shape_cast %108 : vector<1x128x128xbf16> to vector<128x128xbf16>
    %cst_93 = arith.constant dense<0.000000e+00> : vector<8x128xf32>
    %110 = tpu.matmul %107, %109, %cst_93 {dimension_numbers = #tpu.dot_dimension_numbers<[1], [0], [0], [1], [0, 0, 1, 1], [], []>} : vector<8x128xbf16>, vector<128x128xbf16>, vector<8x128xf32> -> vector<8x128xf32>
    %111 = arith.addf %106, %110 : vector<8x128xf32>
    %112 = vector.extract_strided_slice %102 {offsets = [16, 0], sizes = [8, 128], strides = [1, 1]} : vector<32x128xbf16> to vector<8x128xbf16>
    %c2_94 = arith.constant 2 : index
    %c0_95 = arith.constant 0 : index
    %c0_96 = arith.constant 0 : index
    %113 = vector.load %arg6[%c2_94, %c0_95, %c0_96] : memref<4x128x128xbf16, #tpu.memory_space<vmem>>, vector<1x128x128xbf16>
    %114 = vector.shape_cast %113 : vector<1x128x128xbf16> to vector<128x128xbf16>
    %cst_97 = arith.constant dense<0.000000e+00> : vector<8x128xf32>
    %115 = tpu.matmul %112, %114, %cst_97 {dimension_numbers = #tpu.dot_dimension_numbers<[1], [0], [0], [1], [0, 0, 1, 1], [], []>} : vector<8x128xbf16>, vector<128x128xbf16>, vector<8x128xf32> -> vector<8x128xf32>
    %116 = arith.addf %111, %115 : vector<8x128xf32>
    %117 = vector.extract_strided_slice %102 {offsets = [24, 0], sizes = [8, 128], strides = [1, 1]} : vector<32x128xbf16> to vector<8x128xbf16>
    %c3_98 = arith.constant 3 : index
    %c0_99 = arith.constant 0 : index
    %c0_100 = arith.constant 0 : index
    %118 = vector.load %arg6[%c3_98, %c0_99, %c0_100] : memref<4x128x128xbf16, #tpu.memory_space<vmem>>, vector<1x128x128xbf16>
    %119 = vector.shape_cast %118 : vector<1x128x128xbf16> to vector<128x128xbf16>
    %cst_101 = arith.constant dense<0.000000e+00> : vector<8x128xf32>
    %120 = tpu.matmul %117, %119, %cst_101 {dimension_numbers = #tpu.dot_dimension_numbers<[1], [0], [0], [1], [0, 0, 1, 1], [], []>} : vector<8x128xbf16>, vector<128x128xbf16>, vector<8x128xf32> -> vector<8x128xf32>
    %121 = arith.addf %116, %120 : vector<8x128xf32>
    %c0_102 = arith.constant 0 : index
    %c0_103 = arith.constant 0 : index
    %122 = vector.load %arg7[%c0_102, %c0_103] : memref<1x128xf32, #tpu.memory_space<vmem>>, vector<1x128xf32>
    %123 = vector.broadcast %122 : vector<1x128xf32> to vector<8x128xf32>
    %124 = arith.addf %121, %123 : vector<8x128xf32>
    %cst_104 = arith.constant 0.000000e+00 : f32
    %125 = vector.broadcast %cst_104 : f32 to vector<8x128xf32>
    %126 = arith.maximumf %124, %125 : vector<8x128xf32>
    %127 = arith.truncf %126 : vector<8x128xf32> to vector<8x128xbf16>
    %c0_105 = arith.constant 0 : index
    %c0_106 = arith.constant 0 : index
    %128 = vector.load %arg8[%c0_105, %c0_106] : memref<128x128xbf16, #tpu.memory_space<vmem>>, vector<128x128xbf16>
    %cst_107 = arith.constant dense<0.000000e+00> : vector<8x128xf32>
    %129 = tpu.matmul %127, %128, %cst_107 {dimension_numbers = #tpu.dot_dimension_numbers<[1], [0], [0], [1], [0, 0, 1, 1], [], []>} : vector<8x128xbf16>, vector<128x128xbf16>, vector<8x128xf32> -> vector<8x128xf32>
    %c0_108 = arith.constant 0 : index
    %c0_109 = arith.constant 0 : index
    %130 = vector.load %arg9[%c0_108, %c0_109] : memref<1x128xf32, #tpu.memory_space<vmem>>, vector<1x128xf32>
    %131 = vector.broadcast %130 : vector<1x128xf32> to vector<8x128xf32>
    %132 = arith.addf %129, %131 : vector<8x128xf32>
    %133 = tpu.iota {dimensions = array<i32: 1>} : vector<8x128xi32>
    %c10_i32 = arith.constant 10 : i32
    %134 = vector.broadcast %c10_i32 : i32 to vector<8x128xi32>
    %135 = arith.cmpi slt, %133, %134 : vector<8x128xi32>
    %cst_110 = arith.constant -1.000000e+30 : f32
    %136 = vector.broadcast %cst_110 : f32 to vector<8x128xf32>
    %137 = arith.select %135, %132, %136 : vector<8x128xi1>, vector<8x128xf32>
    %cst_111 = arith.constant dense<0xFF800000> : vector<8xf32>
    %138 = vector.multi_reduction <maximumf>, %137, %cst_111 [1] : vector<8x128xf32> to vector<8xf32>
    %139 = vector.shape_cast %138 : vector<8xf32> to vector<8x1xf32>
    %140 = vector.broadcast %139 : vector<8x1xf32> to vector<8x128xf32>
    %141 = arith.subf %137, %140 : vector<8x128xf32>
    %142 = math.exp %141 : vector<8x128xf32>
    %cst_112 = arith.constant dense<0.000000e+00> : vector<8xf32>
    %143 = vector.multi_reduction <add>, %142, %cst_112 [1] : vector<8x128xf32> to vector<8xf32>
    %144 = vector.shape_cast %143 : vector<8xf32> to vector<8x1xf32>
    %145 = math.log %144 : vector<8x1xf32>
    %146 = vector.broadcast %145 : vector<8x1xf32> to vector<8x128xf32>
    %147 = arith.subf %141, %146 : vector<8x128xf32>
    %c0_113 = arith.constant 0 : index
    %c0_114 = arith.constant 0 : index
    %148 = vector.load %arg10[%c0_113, %c0_114] : memref<8x128xf32, #tpu.memory_space<vmem>>, vector<8x128xf32>
    tpu.vector_store %arg10[%c0_113, %c0_114], %147 {strides = array<i32>} : memref<8x128xf32, #tpu.memory_space<vmem>>, vector<8x128xf32>,
    return
  }
  func.func @transform_0(%arg0: i32) -> (i32, i32, i32) {
    %c0_i32 = arith.constant 0 : i32
    %c0_i32_0 = arith.constant 0 : i32
    %c0_i32_1 = arith.constant 0 : i32
    return %arg0, %c0_i32, %c0_i32_0 : i32, i32, i32
  }
  func.func @transform_1(%arg0: i32) -> (i32, i32, i32) {
    %c0_i32 = arith.constant 0 : i32
    %c0_i32_0 = arith.constant 0 : i32
    %c0_i32_1 = arith.constant 0 : i32
    %c0_i32_2 = arith.constant 0 : i32
    return %c0_i32, %c0_i32_0, %c0_i32_1 : i32, i32, i32
  }
  func.func @transform_2(%arg0: i32) -> (i32, i32) {
    %c0_i32 = arith.constant 0 : i32
    %c0_i32_0 = arith.constant 0 : i32
    %c0_i32_1 = arith.constant 0 : i32
    return %c0_i32, %c0_i32_0 : i32, i32
  }
  func.func @transform_3(%arg0: i32) -> (i32, i32, i32) {
    %c0_i32 = arith.constant 0 : i32
    %c0_i32_0 = arith.constant 0 : i32
    %c0_i32_1 = arith.constant 0 : i32
    %c0_i32_2 = arith.constant 0 : i32
    return %c0_i32, %c0_i32_0, %c0_i32_1 : i32, i32, i32
  }
  func.func @transform_4(%arg0: i32) -> (i32, i32) {
    %c0_i32 = arith.constant 0 : i32
    %c0_i32_0 = arith.constant 0 : i32
    %c0_i32_1 = arith.constant 0 : i32
    return %c0_i32, %c0_i32_0 : i32, i32
  }
  func.func @transform_5(%arg0: i32) -> (i32, i32, i32) {
    %c0_i32 = arith.constant 0 : i32
    %c0_i32_0 = arith.constant 0 : i32
    %c0_i32_1 = arith.constant 0 : i32
    %c0_i32_2 = arith.constant 0 : i32
    return %c0_i32, %c0_i32_0, %c0_i32_1 : i32, i32, i32
  }
  func.func @transform_6(%arg0: i32) -> (i32, i32) {
    %c0_i32 = arith.constant 0 : i32
    %c0_i32_0 = arith.constant 0 : i32
    %c0_i32_1 = arith.constant 0 : i32
    return %c0_i32, %c0_i32_0 : i32, i32
  }
  func.func @transform_7(%arg0: i32) -> (i32, i32) {
    %c0_i32 = arith.constant 0 : i32
    %c0_i32_0 = arith.constant 0 : i32
    %c0_i32_1 = arith.constant 0 : i32
    return %c0_i32, %c0_i32_0 : i32, i32
  }
  func.func @transform_8(%arg0: i32) -> (i32, i32) {
    %c0_i32 = arith.constant 0 : i32
    %c0_i32_0 = arith.constant 0 : i32
    %c0_i32_1 = arith.constant 0 : i32
    return %c0_i32, %c0_i32_0 : i32, i32
  }
  func.func @transform_9(%arg0: i32) -> (i32, i32) {
    %c0_i32 = arith.constant 0 : i32
    %c0_i32_0 = arith.constant 0 : i32
    return %arg0, %c0_i32 : i32, i32
  }
}

</mosaic_0001>

<llo_original>
// kernel: net_forward.1
$region0: #{net_forward.1}
  #allocation0 [shape = 'u32[]', space=smem, size = 0x4, offset = 0x4, fixed_abs, tag = 'smem constant byte address 0x4 - core index']
  #allocation1 [shape = 'u32[144,128]{1,0:T(1,128)}', space=vmem, size = 0x12000, scoped, tag = 'internal scratch']
  #allocation2 [shape = 'bf16[2,48,192]{2,1,0:T(16,128)(2,1)}', space=vmem, size = 0xc000, scoped, tag = 'scratch operand']
  %s0 = inlined_call_operand.vmem [shape: bf16[1,192,140], index: 0, kind: input, shape index: {}]
  %s1 = inlined_call_operand.vmem [shape: bf16[2,140,192], index: 1, kind: input, shape index: {}]
  %s2 = inlined_call_operand.vmem [shape: f32[1,192], index: 2, kind: input, shape index: {}]
  %s3 = inlined_call_operand.vmem [shape: bf16[5,192,256], index: 3, kind: input, shape index: {}]
  %s4 = inlined_call_operand.vmem [shape: f32[1,128], index: 4, kind: input, shape index: {}]
  %s5 = inlined_call_operand.vmem [shape: bf16[4,128,128], index: 5, kind: input, shape index: {}]
  %s6 = inlined_call_operand.vmem [shape: f32[1,128], index: 6, kind: input, shape index: {}]
  %s7 = inlined_call_operand.vmem [shape: bf16[128,128], index: 7, kind: input, shape index: {}]
  %s8 = inlined_call_operand.vmem [shape: f32[1,128], index: 8, kind: input, shape index: {}]
  %s9 = inlined_call_operand.vmem [shape: f32[8,128], index: 9, kind: output, shape index: {}]
  %s10 = sld [smem:[#allocation0]]
  $region46: #{net_forward.1} parent=0
    _
  %s12 = ssub.s32 1, %s10
  %s13 = scalar_select 0, %s12, %s10
  // Predicated region
  $region2: #{net_forward.1} parent=0 // pred_check
    _
  $region3: #{net_forward.1} parent=0 // pred_check_branch
    %15 = sbr.rel (0) target = $region5
  $region4: #{net_forward.1} parent=0 // pred_region
    _
  $region5: #{net_forward.1} parent=0 // pred_fallthru
    _
  // Predicated region
  $region6: #{net_forward.1} parent=0 // pred_check
    _
  $region7: #{net_forward.1} parent=0 // pred_check_branch
    %17 = sbr.rel (0) target = $region9
  $region8: #{net_forward.1} parent=0 // pred_region
    _
  $region9: #{net_forward.1} parent=0 // pred_fallthru
    _
  // Predicated region
  $region10: #{net_forward.1} parent=0 // pred_check
    _
  $region11: #{net_forward.1} parent=0 // pred_check_branch
    %19 = sbr.rel (0) target = $region13
  $region12: #{net_forward.1} parent=0 // pred_region
    _
  $region13: #{net_forward.1} parent=0 // pred_fallthru
    _
  // Predicated region
  $region14: #{net_forward.1} parent=0 // pred_check
    _
  $region15: #{net_forward.1} parent=0 // pred_check_branch
    %21 = sbr.rel (0) target = $region17
  $region16: #{net_forward.1} parent=0 // pred_region
    _
  $region17: #{net_forward.1} parent=0 // pred_fallthru
    _
  // Predicated region
  $region18: #{net_forward.1} parent=0 // pred_check
    _
  $region19: #{net_forward.1} parent=0 // pred_check_branch
    %23 = sbr.rel (0) target = $region21
  $region20: #{net_forward.1} parent=0 // pred_region
    _
  $region21: #{net_forward.1} parent=0 // pred_fallthru
    _
  // Predicated region
  $region22: #{net_forward.1} parent=0 // pred_check
    _
  $region23: #{net_forward.1} parent=0 // pred_check_branch
    %25 = sbr.rel (0) target = $region25
  $region24: #{net_forward.1} parent=0 // pred_region
    _
  $region25: #{net_forward.1} parent=0 // pred_fallthru
    _
  // Predicated region
  $region26: #{net_forward.1} parent=0 // pred_check
    _
  $region27: #{net_forward.1} parent=0 // pred_check_branch
    %27 = sbr.rel (0) target = $region29
  $region28: #{net_forward.1} parent=0 // pred_region
    _
  $region29: #{net_forward.1} parent=0 // pred_fallthru
    _
  // Predicated region
  $region30: #{net_forward.1} parent=0 // pred_check
    _
  $region31: #{net_forward.1} parent=0 // pred_check_branch
    %29 = sbr.rel (0) target = $region33
  $region32: #{net_forward.1} parent=0 // pred_region
    _
  $region33: #{net_forward.1} parent=0 // pred_fallthru
    _
  // Predicated region
  $region34: #{net_forward.1} parent=0 // pred_check
    _
  $region35: #{net_forward.1} parent=0 // pred_check_branch
    %31 = sbr.rel (0) target = $region37
  $region36: #{net_forward.1} parent=0 // pred_region
    _
  $region37: #{net_forward.1} parent=0 // pred_fallthru
    _
  %v33 = vld [vmem:[%s0] sm:$0xff]
  %v34 = vld [vmem:[%s0 + $0x8] sm:$0xff]
  %v35 = vld [vmem:[%s0 + $0x10] sm:$0xff]
  %v36 = vld [vmem:[%s0 + $0x18] sm:$0xff]
  %v37 = vld [vmem:[%s0 + $0x20] sm:$0xff]
  %v38 = vld [vmem:[%s0 + $0x28] sm:$0xff]
  %v39 = vld [vmem:[%s0 + $0x30] sm:$0xff]
  %v40 = vld [vmem:[%s0 + $0x38] sm:$0xff]
  %v41 = vld [vmem:[%s0 + $0x40] sm:$0xff]
  %v42 = vld [vmem:[%s0 + $0x48] sm:$0xff]
  %v43 = vld [vmem:[%s0 + $0x50] sm:$0xff]
  %v44 = vld [vmem:[%s0 + $0x58] sm:$0xff]
  %v45 = vld [vmem:[%s0 + $0x60] sm:$0xff]
  %v46 = vld [vmem:[%s0 + $0x68] sm:$0xff]
  %v47 = vld [vmem:[%s0 + $0x70] sm:$0xff]
  %v48 = vld [vmem:[%s0 + $0x78] sm:$0xff]
  %v49 = vld [vmem:[%s0 + $0x80] sm:$0xff]
  %v50 = vld [vmem:[%s0 + $0x88] sm:$0xff]
  %v51 = vld [vmem:[%s0 + $0x90] sm:$0xff]
  %v52 = vld [vmem:[%s0 + $0x98] sm:$0xff]
  %v53 = vld [vmem:[%s0 + $0xa0] sm:$0xff]
  %v54 = vld [vmem:[%s0 + $0xa8] sm:$0xff]
  %v55 = vld [vmem:[%s0 + $0xb0] sm:$0xff]
  %v56 = vld [vmem:[%s0 + $0xb8] sm:$0xff]
  %v57 = vld [vmem:[%s2] sm:$0x3]
  %v58 = vld [vmem:[%s4] sm:$0x1]
  %v59 = vld [vmem:[%s1] sm:$0xff]
  %v60 = vld [vmem:[%s1 + $0x8] sm:$0xff]
  %v61 = vld [vmem:[%s1 + $0x10] sm:$0xff]
  %v62 = vld [vmem:[%s1 + $0x18] sm:$0xff]
  %v63 = vld [vmem:[%s1 + $0x20] sm:$0xff]
  %v64 = vld [vmem:[%s1 + $0x28] sm:$0xff]
  %v65 = vld [vmem:[%s1 + $0x30] sm:$0xff]
  %v66 = vld [vmem:[%s1 + $0x38] sm:$0xff]
  %v67 = vld [vmem:[%s1 + $0x40] sm:$0xff]
  %v68 = vld [vmem:[%s1 + $0x48] sm:$0xff]
  %v69 = vld [vmem:[%s1 + $0x50] sm:$0xff]
  %v70 = vld [vmem:[%s1 + $0x58] sm:$0xff]
  %v71 = vld [vmem:[%s1 + $0x60] sm:$0xff]
  %v72 = vld [vmem:[%s1 + $0x68] sm:$0xff]
  %v73 = vld [vmem:[%s1 + $0x70] sm:$0xff]
  %v74 = vld [vmem:[%s1 + $0x78] sm:$0xff]
  %v75 = vld [vmem:[%s1 + $0x80] sm:$0xff]
  %v76 = vld [vmem:[%s1 + $0x88] sm:$0x33]
  %v101 = vunpack.c.l.b16 %v33
  %v102 = vunpack.c.h.b16 %v33
  %v103 = vunpack.c.l.b16 %v34
  %v104 = vunpack.c.h.b16 %v34
  %v105 = vunpack.c.l.b16 %v35
  %v106 = vunpack.c.h.b16 %v35
  %v107 = vunpack.c.l.b16 %v36
  %v108 = vunpack.c.h.b16 %v36
  %v109 = vunpack.c.l.b16 %v37
  %v110 = vunpack.c.h.b16 %v37
  %v111 = vunpack.c.l.b16 %v38
  %v112 = vunpack.c.h.b16 %v38
  %v113 = vunpack.c.l.b16 %v39
  %v114 = vunpack.c.h.b16 %v39
  %v115 = vunpack.c.l.b16 %v40
  %v116 = vunpack.c.h.b16 %v40
  %v117 = vunpack.c.l.b16 %v41
  %v118 = vunpack.c.h.b16 %v41
  %v119 = vunpack.c.l.b16 %v42
  %v120 = vunpack.c.h.b16 %v42
  %v121 = vunpack.c.l.b16 %v43
  %v122 = vunpack.c.h.b16 %v43
  %v123 = vunpack.c.l.b16 %v44
  %v124 = vunpack.c.h.b16 %v44
  %v125 = vunpack.c.l.b16 %v45
  %v126 = vunpack.c.h.b16 %v45
  %v127 = vunpack.c.l.b16 %v46
  %v128 = vunpack.c.h.b16 %v46
  %v129 = vunpack.c.l.b16 %v47
  %v130 = vunpack.c.h.b16 %v47
  %v131 = vunpack.c.l.b16 %v48
  %v132 = vunpack.c.h.b16 %v48
  %v133 = vunpack.c.l.b16 %v49
  %v134 = vunpack.c.h.b16 %v49
  %v135 = vunpack.c.l.b16 %v50
  %v136 = vunpack.c.h.b16 %v50
  %v137 = vunpack.c.l.b16 %v51
  %v138 = vunpack.c.h.b16 %v51
  %v139 = vunpack.c.l.b16 %v52
  %v140 = vunpack.c.h.b16 %v52
  %v141 = vunpack.c.l.b16 %v53
  %v142 = vunpack.c.h.b16 %v53
  %v143 = vunpack.c.l.b16 %v54
  %v144 = vunpack.c.h.b16 %v54
  %v145 = vunpack.c.l.b16 %v55
  %v146 = vunpack.c.h.b16 %v55
  %v147 = vunpack.c.l.b16 %v56
  %v148 = vunpack.c.h.b16 %v56
  %v149 = vpack.c.b16 %v103, %v101
  %v150 = vpack.c.b16 %v104, %v102
  %v151 = vpack.c.b16 %v107, %v105
  %v152 = vpack.c.b16 %v108, %v106
  %v153 = vpack.c.b16 %v111, %v109
  %v154 = vpack.c.b16 %v112, %v110
  %v155 = vpack.c.b16 %v115, %v113
  %v156 = vpack.c.b16 %v116, %v114
  %v157 = vpack.c.b16 %v119, %v117
  %v158 = vpack.c.b16 %v120, %v118
  %v159 = vpack.c.b16 %v123, %v121
  %v160 = vpack.c.b16 %v124, %v122
  %v161 = vpack.c.b16 %v127, %v125
  %v162 = vpack.c.b16 %v128, %v126
  %v163 = vpack.c.b16 %v131, %v129
  %v164 = vpack.c.b16 %v132, %v130
  %v165 = vpack.c.b16 %v135, %v133
  %v166 = vpack.c.b16 %v136, %v134
  %v167 = vpack.c.b16 %v139, %v137
  %v168 = vpack.c.b16 %v140, %v138
  %v169 = vpack.c.b16 %v143, %v141
  %v170 = vpack.c.b16 %v144, %v142
  %v171 = vpack.c.b16 %v147, %v145
  %v172 = vpack.c.b16 %v148, %v146
  %v203 = vunpack.c.l.b16 %v59
  %v204 = vunpack.c.h.b16 %v59
  %v205 = vunpack.c.l.b16 %v60
  %v206 = vunpack.c.h.b16 %v60
  %v207 = vunpack.c.l.b16 %v61
  %v208 = vunpack.c.h.b16 %v61
  %v209 = vunpack.c.l.b16 %v62
  %v210 = vunpack.c.h.b16 %v62
  %v211 = vunpack.c.l.b16 %v63
  %v212 = vunpack.c.h.b16 %v63
  %v213 = vunpack.c.l.b16 %v64
  %v214 = vunpack.c.h.b16 %v64
  %v215 = vunpack.c.l.b16 %v65
  %v216 = vunpack.c.h.b16 %v65
  %v217 = vunpack.c.l.b16 %v66
  %v218 = vunpack.c.h.b16 %v66
  %v219 = vunpack.c.l.b16 %v67
  %v220 = vunpack.c.h.b16 %v67
  %v221 = vunpack.c.l.b16 %v68
  %v222 = vunpack.c.h.b16 %v68
  %v223 = vunpack.c.l.b16 %v69
  %v224 = vunpack.c.h.b16 %v69
  %v225 = vunpack.c.l.b16 %v70
  %v226 = vunpack.c.h.b16 %v70
  %v227 = vunpack.c.l.b16 %v71
  %v228 = vunpack.c.h.b16 %v71
  %v229 = vunpack.c.l.b16 %v72
  %v230 = vunpack.c.h.b16 %v72
  %v231 = vunpack.c.l.b16 %v73
  %v232 = vunpack.c.h.b16 %v73
  %v233 = vunpack.c.l.b16 %v74
  %v234 = vunpack.c.h.b16 %v74
  %v235 = vunpack.c.l.b16 %v75
  %v236 = vunpack.c.h.b16 %v75
  %v237 = vunpack.c.l.b16 %v76
  %v238 = vunpack.c.h.b16 %v76
  %v239 = vpack.c.b16 %v205, %v203
  %v240 = vpack.c.b16 %v206, %v204
  %v241 = vpack.c.b16 %v209, %v207
  %v242 = vpack.c.b16 %v210, %v208
  %v243 = vpack.c.b16 %v213, %v211
  %v244 = vpack.c.b16 %v214, %v212
  %v245 = vpack.c.b16 %v217, %v215
  %v246 = vpack.c.b16 %v218, %v216
  %v247 = vpack.c.b16 %v221, %v219
  %v248 = vpack.c.b16 %v222, %v220
  %v249 = vpack.c.b16 %v225, %v223
  %v250 = vpack.c.b16 %v226, %v224
  %v251 = vpack.c.b16 %v229, %v227
  %v252 = vpack.c.b16 %v230, %v228
  %v253 = vpack.c.b16 %v233, %v231
  %v254 = vpack.c.b16 %v234, %v232
  %v255 = vpack.c.b16 %v237, %v235
  %v256 = vpack.c.b16 %v238, %v236
  %vm273 = vcmask 97280
  %v275 = vsel %vm273, %v150, 0
  %v278 = vsel %vm273, %v152, 0
  %v281 = vsel %vm273, %v154, 0
  %v284 = vsel %vm273, %v156, 0
  %v287 = vsel %vm273, %v158, 0
  %v290 = vsel %vm273, %v160, 0
  %v293 = vsel %vm273, %v162, 0
  %v296 = vsel %vm273, %v164, 0
  %v299 = vsel %vm273, %v166, 0
  %v302 = vsel %vm273, %v168, 0
  %v305 = vsel %vm273, %v170, 0
  %v308 = vsel %vm273, %v172, 0
  %vm310 = vcmask 1045504
  %v312 = vsel %vm310, %v255, 0
  %v315 = vsel %vm310, %v256, 0
  %317 = vmatprep.subr.bf16.mxu0 %v240
  %318 = vmatpush1.bf16.msra.mxu0 %v239
  %319 = vmatprep.subr.bf16.mxu0 %v242
  %320 = vmatpush1.bf16.msra.mxu0 %v241
  %321 = vmatprep.subr.bf16.mxu0 %v244
  %322 = vmatpush1.bf16.msra.mxu0 %v243
  %323 = vmatprep.subr.bf16.mxu0 %v246
  %324 = vmatpush1.bf16.msra.mxu0 %v245
  %325 = vmatprep.subr.bf16.mxu0 %v248
  %326 = vmatpush1.bf16.msra.mxu0 %v247
  %327 = vmatprep.subr.bf16.mxu0 %v250
  %328 = vmatpush1.bf16.msra.mxu0 %v249
  %329 = vmatprep.subr.bf16.mxu0 %v252
  %330 = vmatpush1.bf16.msra.mxu0 %v251
  %331 = vmatprep.subr.bf16.mxu0 %v254
  %332 = vmatpush1.bf16.msra.mxu0 %v253
  %333 = vmatprep.subr.bf16.mxu0 %v315
  %334 = vmatpush1.bf16.msra.mxu0 %v312
  %335 = vmatprep.subr.bf16.mxu0 0
  %336 = vmatpush1.bf16.msra.mxu0 0
  %337 = vmatprep.subr.bf16.mxu0 0
  %338 = vmatpush1.bf16.msra.mxu0 0
  %339 = vmatprep.subr.bf16.mxu0 0
  %340 = vmatpush1.bf16.msra.mxu0 0
  %341 = vmatprep.subr.bf16.mxu0 0
  %342 = vmatpush1.bf16.msra.mxu0 0
  %343 = vmatprep.subr.bf16.mxu0 0
  %344 = vmatpush1.bf16.msra.mxu0 0
  %345 = vmatprep.subr.bf16.mxu0 0
  %346 = vmatpush1.bf16.msra.mxu0 0
  %347 = vmatprep.subr.bf16.mxu0 0
  %348 = vmatpush1.bf16.msra.mxu0 0
  %349 = vmatprep.mubr.bf16.mxu0 %v275
  %350 = vmatmul.mubr.bf16.gmra.mrb[0].mxu0 %v149
  %v351 = vpop.f32.mrb[0].mxu0
  %v352 = vadd.f32 0.0, %v351
  %v353 = vpop.f32.mrb[0].mxu0
  %v354 = vadd.f32 0.0, %v353
  %v355 = vpop.f32.mrb[0].mxu0
  %v356 = vadd.f32 0.0, %v355
  %v357 = vpop.f32.mrb[0].mxu0
  %v358 = vadd.f32 0.0, %v357
  %359 = vmatprep.mubr.bf16.mxu0 %v278
  %360 = vmatmul.mubr.bf16.gmra.mrb[0].mxu0 %v151
  %v361 = vpop.f32.mrb[0].mxu0
  %v362 = vadd.f32 0.0, %v361
  %v363 = vpop.f32.mrb[0].mxu0
  %v364 = vadd.f32 0.0, %v363
  %v365 = vpop.f32.mrb[0].mxu0
  %v366 = vadd.f32 0.0, %v365
  %v367 = vpop.f32.mrb[0].mxu0
  %v368 = vadd.f32 0.0, %v367
  %369 = vmatprep.mubr.bf16.mxu0 %v281
  %370 = vmatmul.mubr.bf16.gmra.mrb[0].mxu0 %v153
  %v371 = vpop.f32.mrb[0].mxu0
  %v372 = vadd.f32 0.0, %v371
  %v373 = vpop.f32.mrb[0].mxu0
  %v374 = vadd.f32 0.0, %v373
  %v375 = vpop.f32.mrb[0].mxu0
  %v376 = vadd.f32 0.0, %v375
  %v377 = vpop.f32.mrb[0].mxu0
  %v378 = vadd.f32 0.0, %v377
  %379 = vmatprep.mubr.bf16.mxu0 %v284
  %380 = vmatmul.mubr.bf16.gmra.mrb[0].mxu0 %v155
  %v381 = vpop.f32.mrb[0].mxu0
  %v382 = vadd.f32 0.0, %v381
  %v383 = vpop.f32.mrb[0].mxu0
  %v384 = vadd.f32 0.0, %v383
  %v385 = vpop.f32.mrb[0].mxu0
  %v386 = vadd.f32 0.0, %v385
  %v387 = vpop.f32.mrb[0].mxu0
  %v388 = vadd.f32 0.0, %v387
  %389 = vmatprep.mubr.bf16.mxu0 %v287
  %390 = vmatmul.mubr.bf16.gmra.mrb[0].mxu0 %v157
  %v391 = vpop.f32.mrb[0].mxu0
  %v392 = vadd.f32 0.0, %v391
  %v393 = vpop.f32.mrb[0].mxu0
  %v394 = vadd.f32 0.0, %v393
  %v395 = vpop.f32.mrb[0].mxu0
  %v396 = vadd.f32 0.0, %v395
  %v397 = vpop.f32.mrb[0].mxu0
  %v398 = vadd.f32 0.0, %v397
  %399 = vmatprep.mubr.bf16.mxu0 %v290
  %400 = vmatmul.mubr.bf16.gmra.mrb[0].mxu0 %v159
  %v401 = vpop.f32.mrb[0].mxu0
  %v402 = vadd.f32 0.0, %v401
  %v403 = vpop.f32.mrb[0].mxu0
  %v404 = vadd.f32 0.0, %v403
  %v405 = vpop.f32.mrb[0].mxu0
  %v406 = vadd.f32 0.0, %v405
  %v407 = vpop.f32.mrb[0].mxu0
  %v408 = vadd.f32 0.0, %v407
  %409 = vmatprep.mubr.bf16.mxu0 %v293
  %410 = vmatmul.mubr.bf16.gmra.mrb[0].mxu0 %v161
  %v411 = vpop.f32.mrb[0].mxu0
  %v412 = vadd.f32 0.0, %v411
  %v413 = vpop.f32.mrb[0].mxu0
  %v414 = vadd.f32 0.0, %v413
  %v415 = vpop.f32.mrb[0].mxu0
  %v416 = vadd.f32 0.0, %v415
  %v417 = vpop.f32.mrb[0].mxu0
  %v418 = vadd.f32 0.0, %v417
  %419 = vmatprep.mubr.bf16.mxu0 %v296
  %420 = vmatmul.mubr.bf16.gmra.mrb[0].mxu0 %v163
  %v421 = vpop.f32.mrb[0].mxu0
  %v422 = vadd.f32 0.0, %v421
  %v423 = vpop.f32.mrb[0].mxu0
  %v424 = vadd.f32 0.0, %v423
  %v425 = vpop.f32.mrb[0].mxu0
  %v426 = vadd.f32 0.0, %v425
  %v427 = vpop.f32.mrb[0].mxu0
  %v428 = vadd.f32 0.0, %v427
  %429 = vmatprep.mubr.bf16.mxu0 %v299
  %430 = vmatmul.mubr.bf16.gmra.mrb[0].mxu0 %v165
  %v431 = vpop.f32.mrb[0].mxu0
  %v432 = vadd.f32 0.0, %v431
  %v433 = vpop.f32.mrb[0].mxu0
  %v434 = vadd.f32 0.0, %v433
  %v435 = vpop.f32.mrb[0].mxu0
  %v436 = vadd.f32 0.0, %v435
  %v437 = vpop.f32.mrb[0].mxu0
  %v438 = vadd.f32 0.0, %v437
  %439 = vmatprep.mubr.bf16.mxu0 %v302
  %440 = vmatmul.mubr.bf16.gmra.mrb[0].mxu0 %v167
  %v441 = vpop.f32.mrb[0].mxu0
  %v442 = vadd.f32 0.0, %v441
  %v443 = vpop.f32.mrb[0].mxu0
  %v444 = vadd.f32 0.0, %v443
  %v445 = vpop.f32.mrb[0].mxu0
  %v446 = vadd.f32 0.0, %v445
  %v447 = vpop.f32.mrb[0].mxu0
  %v448 = vadd.f32 0.0, %v447
  %449 = vmatprep.mubr.bf16.mxu0 %v305
  %450 = vmatmul.mubr.bf16.gmra.mrb[0].mxu0 %v169
  %v451 = vpop.f32.mrb[0].mxu0
  %v452 = vadd.f32 0.0, %v451
  %v453 = vpop.f32.mrb[0].mxu0
  %v454 = vadd.f32 0.0, %v453
  %v455 = vpop.f32.mrb[0].mxu0
  %v456 = vadd.f32 0.0, %v455
  %v457 = vpop.f32.mrb[0].mxu0
  %v458 = vadd.f32 0.0, %v457
  %459 = vmatprep.mubr.bf16.mxu0 %v308
  %460 = vmatmul.mubr.bf16.gmra.mrb[0].mxu0 %v171
  %v461 = vpop.f32.mrb[0].mxu0
  %v462 = vadd.f32 0.0, %v461
  %v463 = vpop.f32.mrb[0].mxu0
  %v464 = vadd.f32 0.0, %v463
  %v465 = vpop.f32.mrb[0].mxu0
  %v466 = vadd.f32 0.0, %v465
  %v467 = vpop.f32.mrb[0].mxu0
  %v468 = vadd.f32 0.0, %v467
  %469 = vdwg.mxu0
  %s470 = scalar_lea.vmem %s1, 144
  %v471 = vld [vmem:[%s470] sm:$0xff]
  %v472 = vld [vmem:[%s470 + $0x8] sm:$0xff]
  %v473 = vld [vmem:[%s470 + $0x10] sm:$0xff]
  %v474 = vld [vmem:[%s470 + $0x18] sm:$0xff]
  %v475 = vld [vmem:[%s470 + $0x20] sm:$0xff]
  %v476 = vld [vmem:[%s470 + $0x28] sm:$0xff]
  %v477 = vld [vmem:[%s470 + $0x30] sm:$0xff]
  %v478 = vld [vmem:[%s470 + $0x38] sm:$0xff]
  %v479 = vld [vmem:[%s470 + $0x40] sm:$0xff]
  %v480 = vld [vmem:[%s470 + $0x48] sm:$0xff]
  %v481 = vld [vmem:[%s470 + $0x50] sm:$0xff]
  %v482 = vld [vmem:[%s470 + $0x58] sm:$0xff]
  %v483 = vld [vmem:[%s470 + $0x60] sm:$0xff]
  %v484 = vld [vmem:[%s470 + $0x68] sm:$0xff]
  %v485 = vld [vmem:[%s470 + $0x70] sm:$0xff]
  %v486 = vld [vmem:[%s470 + $0x78] sm:$0xff]
  %v487 = vld [vmem:[%s470 + $0x80] sm:$0xff]
  %v488 = vld [vmem:[%s470 + $0x88] sm:$0x33]
  %v507 = vunpack.c.l.b16 %v471
  %v508 = vunpack.c.h.b16 %v471
  %v509 = vunpack.c.l.b16 %v472
  %v510 = vunpack.c.h.b16 %v472
  %v511 = vunpack.c.l.b16 %v473
  %v512 = vunpack.c.h.b16 %v473
  %v513 = vunpack.c.l.b16 %v474
  %v514 = vunpack.c.h.b16 %v474
  %v515 = vunpack.c.l.b16 %v475
  %v516 = vunpack.c.h.b16 %v475
  %v517 = vunpack.c.l.b16 %v476
  %v518 = vunpack.c.h.b16 %v476
  %v519 = vunpack.c.l.b16 %v477
  %v520 = vunpack.c.h.b16 %v477
  %v521 = vunpack.c.l.b16 %v478
  %v522 = vunpack.c.h.b16 %v478
  %v523 = vunpack.c.l.b16 %v479
  %v524 = vunpack.c.h.b16 %v479
  %v525 = vunpack.c.l.b16 %v480
  %v526 = vunpack.c.h.b16 %v480
  %v527 = vunpack.c.l.b16 %v481
  %v528 = vunpack.c.h.b16 %v481
  %v529 = vunpack.c.l.b16 %v482
  %v530 = vunpack.c.h.b16 %v482
  %v531 = vunpack.c.l.b16 %v483
  %v532 = vunpack.c.h.b16 %v483
  %v533 = vunpack.c.l.b16 %v484
  %v534 = vunpack.c.h.b16 %v484
  %v535 = vunpack.c.l.b16 %v485
  %v536 = vunpack.c.h.b16 %v485
  %v537 = vunpack.c.l.b16 %v486
  %v538 = vunpack.c.h.b16 %v486
  %v539 = vunpack.c.l.b16 %v487
  %v540 = vunpack.c.h.b16 %v487
  %v541 = vunpack.c.l.b16 %v488
  %v542 = vunpack.c.h.b16 %v488
  %v543 = vpack.c.b16 %v509, %v507
  %v544 = vpack.c.b16 %v510, %v508
  %v545 = vpack.c.b16 %v513, %v511
  %v546 = vpack.c.b16 %v514, %v512
  %v547 = vpack.c.b16 %v517, %v515
  %v548 = vpack.c.b16 %v518, %v516
  %v549 = vpack.c.b16 %v521, %v519
  %v550 = vpack.c.b16 %v522, %v520
  %v551 = vpack.c.b16 %v525, %v523
  %v552 = vpack.c.b16 %v526, %v524
  %v553 = vpack.c.b16 %v529, %v527
  %v554 = vpack.c.b16 %v530, %v528
  %v555 = vpack.c.b16 %v533, %v531
  %v556 = vpack.c.b16 %v534, %v532
  %v557 = vpack.c.b16 %v537, %v535
  %v558 = vpack.c.b16 %v538, %v536
  %v559 = vpack.c.b16 %v541, %v539
  %v560 = vpack.c.b16 %v542, %v540
  %v578 = vsel %vm310, %v559, 0
  %v581 = vsel %vm310, %v560, 0
  %583 = vmatprep.subr.bf16.mxu0 %v544
  %584 = vmatpush1.bf16.msra.mxu0 %v543
  %585 = vmatprep.subr.bf16.mxu0 %v546
  %586 = vmatpush1.bf16.msra.mxu0 %v545
  %587 = vmatprep.subr.bf16.mxu0 %v548
  %588 = vmatpush1.bf16.msra.mxu0 %v547
  %589 = vmatprep.subr.bf16.mxu0 %v550
  %590 = vmatpush1.bf16.msra.mxu0 %v549
  %591 = vmatprep.subr.bf16.mxu0 %v552
  %592 = vmatpush1.bf16.msra.mxu0 %v551
  %593 = vmatprep.subr.bf16.mxu0 %v554
  %594 = vmatpush1.bf16.msra.mxu0 %v553
  %595 = vmatprep.subr.bf16.mxu0 %v556
  %596 = vmatpush1.bf16.msra.mxu0 %v555
  %597 = vmatprep.subr.bf16.mxu0 %v558
  %598 = vmatpush1.bf16.msra.mxu0 %v557
  %599 = vmatprep.subr.bf16.mxu0 %v581
  %600 = vmatpush1.bf16.msra.mxu0 %v578
  %601 = vmatprep.subr.bf16.mxu0 0
  %602 = vmatpush1.bf16.msra.mxu0 0
  %603 = vmatprep.subr.bf16.mxu0 0
  %604 = vmatpush1.bf16.msra.mxu0 0
  %605 = vmatprep.subr.bf16.mxu0 0
  %606 = vmatpush1.bf16.msra.mxu0 0
  %607 = vmatprep.subr.bf16.mxu0 0
  %608 = vmatpush1.bf16.msra.mxu0 0
  %609 = vmatprep.subr.bf16.mxu0 0
  %610 = vmatpush1.bf16.msra.mxu0 0
  %611 = vmatprep.subr.bf16.mxu0 0
  %612 = vmatpush1.bf16.msra.mxu0 0
  %613 = vmatprep.subr.bf16.mxu0 0
  %614 = vmatpush1.bf16.msra.mxu0 0
  %615 = vmatprep.mubr.bf16.mxu0 %v275
  %616 = vmatmul.mubr.bf16.gmra.mrb[0].mxu0 %v149
  %v617 = vpop.f32.mrb[0].mxu0
  %v618 = vadd.f32 0.0, %v617
  %v619 = vpop.f32.mrb[0].mxu0
  %v620 = vadd.f32 0.0, %v619
  %v621 = vpop.f32.mrb[0].mxu0
  %v622 = vadd.f32 0.0, %v621
  %v623 = vpop.f32.mrb[0].mxu0
  %v624 = vadd.f32 0.0, %v623
  %625 = vmatprep.mubr.bf16.mxu0 %v278
  %626 = vmatmul.mubr.bf16.gmra.mrb[0].mxu0 %v151
  %v627 = vpop.f32.mrb[0].mxu0
  %v628 = vadd.f32 0.0, %v627
  %v629 = vpop.f32.mrb[0].mxu0
  %v630 = vadd.f32 0.0, %v629
  %v631 = vpop.f32.mrb[0].mxu0
  %v632 = vadd.f32 0.0, %v631
  %v633 = vpop.f32.mrb[0].mxu0
  %v634 = vadd.f32 0.0, %v633
  %635 = vmatprep.mubr.bf16.mxu0 %v281
  %636 = vmatmul.mubr.bf16.gmra.mrb[0].mxu0 %v153
  %v637 = vpop.f32.mrb[0].mxu0
  %v638 = vadd.f32 0.0, %v637
  %v639 = vpop.f32.mrb[0].mxu0
  %v640 = vadd.f32 0.0, %v639
  %v641 = vpop.f32.mrb[0].mxu0
  %v642 = vadd.f32 0.0, %v641
  %v643 = vpop.f32.mrb[0].mxu0
  %v644 = vadd.f32 0.0, %v643
  %645 = vmatprep.mubr.bf16.mxu0 %v284
  %646 = vmatmul.mubr.bf16.gmra.mrb[0].mxu0 %v155
  %v647 = vpop.f32.mrb[0].mxu0
  %v648 = vadd.f32 0.0, %v647
  %v649 = vpop.f32.mrb[0].mxu0
  %v650 = vadd.f32 0.0, %v649
  %v651 = vpop.f32.mrb[0].mxu0
  %v652 = vadd.f32 0.0, %v651
  %v653 = vpop.f32.mrb[0].mxu0
  %v654 = vadd.f32 0.0, %v653
  %655 = vmatprep.mubr.bf16.mxu0 %v287
  %656 = vmatmul.mubr.bf16.gmra.mrb[0].mxu0 %v157
  %v657 = vpop.f32.mrb[0].mxu0
  %v658 = vadd.f32 0.0, %v657
  %v659 = vpop.f32.mrb[0].mxu0
  %v660 = vadd.f32 0.0, %v659
  %v661 = vpop.f32.mrb[0].mxu0
  %v662 = vadd.f32 0.0, %v661
  %v663 = vpop.f32.mrb[0].mxu0
  %v664 = vadd.f32 0.0, %v663
  %665 = vmatprep.mubr.bf16.mxu0 %v290
  %666 = vmatmul.mubr.bf16.gmra.mrb[0].mxu0 %v159
  %v667 = vpop.f32.mrb[0].mxu0
  %v668 = vadd.f32 0.0, %v667
  %v669 = vpop.f32.mrb[0].mxu0
  %v670 = vadd.f32 0.0, %v669
  %v671 = vpop.f32.mrb[0].mxu0
  %v672 = vadd.f32 0.0, %v671
  %v673 = vpop.f32.mrb[0].mxu0
  %v674 = vadd.f32 0.0, %v673
  %675 = vmatprep.mubr.bf16.mxu0 %v293
  %676 = vmatmul.mubr.bf16.gmra.mrb[0].mxu0 %v161
  %v677 = vpop.f32.mrb[0].mxu0
  %v678 = vadd.f32 0.0, %v677
  %v679 = vpop.f32.mrb[0].mxu0
  %v680 = vadd.f32 0.0, %v679
  %v681 = vpop.f32.mrb[0].mxu0
  %v682 = vadd.f32 0.0, %v681
  %v683 = vpop.f32.mrb[0].mxu0
  %v684 = vadd.f32 0.0, %v683
  %685 = vmatprep.mubr.bf16.mxu0 %v296
  %686 = vmatmul.mubr.bf16.gmra.mrb[0].mxu0 %v163
  %v687 = vpop.f32.mrb[0].mxu0
  %v688 = vadd.f32 0.0, %v687
  %v689 = vpop.f32.mrb[0].mxu0
  %v690 = vadd.f32 0.0, %v689
  %v691 = vpop.f32.mrb[0].mxu0
  %v692 = vadd.f32 0.0, %v691
  %v693 = vpop.f32.mrb[0].mxu0
  %v694 = vadd.f32 0.0, %v693
  %695 = vmatprep.mubr.bf16.mxu0 %v299
  %696 = vmatmul.mubr.bf16.gmra.mrb[0].mxu0 %v165
  %v697 = vpop.f32.mrb[0].mxu0
  %v698 = vadd.f32 0.0, %v697
  %v699 = vpop.f32.mrb[0].mxu0
  %v700 = vadd.f32 0.0, %v699
  %v701 = vpop.f32.mrb[0].mxu0
  %v702 = vadd.f32 0.0, %v701
  %v703 = vpop.f32.mrb[0].mxu0
  %v704 = vadd.f32 0.0, %v703
  %705 = vmatprep.mubr.bf16.mxu0 %v302
  %706 = vmatmul.mubr.bf16.gmra.mrb[0].mxu0 %v167
  %v707 = vpop.f32.mrb[0].mxu0
  %v708 = vadd.f32 0.0, %v707
  %v709 = vpop.f32.mrb[0].mxu0
  %v710 = vadd.f32 0.0, %v709
  %v711 = vpop.f32.mrb[0].mxu0
  %v712 = vadd.f32 0.0, %v711
  %v713 = vpop.f32.mrb[0].mxu0
  %v714 = vadd.f32 0.0, %v713
  %715 = vmatprep.mubr.bf16.mxu0 %v305
  %716 = vmatmul.mubr.bf16.gmra.mrb[0].mxu0 %v169
  %v717 = vpop.f32.mrb[0].mxu0
  %v718 = vadd.f32 0.0, %v717
  %v719 = vpop.f32.mrb[0].mxu0
  %v720 = vadd.f32 0.0, %v719
  %v721 = vpop.f32.mrb[0].mxu0
  %v722 = vadd.f32 0.0, %v721
  %v723 = vpop.f32.mrb[0].mxu0
  %v724 = vadd.f32 0.0, %v723
  %725 = vmatprep.mubr.bf16.mxu0 %v308
  %726 = vmatmul.mubr.bf16.gmra.mrb[0].mxu0 %v171
  %v727 = vpop.f32.mrb[0].mxu0
  %v728 = vadd.f32 0.0, %v727
  %v729 = vpop.f32.mrb[0].mxu0
  %v730 = vadd.f32 0.0, %v729
  %v731 = vpop.f32.mrb[0].mxu0
  %v732 = vadd.f32 0.0, %v731
  %v733 = vpop.f32.mrb[0].mxu0
  %v734 = vadd.f32 0.0, %v733
  %735 = vdwg.mxu0
  %v736 = vmax.f32 %v352, %v618
  %v737 = vmax.f32 %v354, %v620
  %v738 = vmax.f32 %v356, %v622
  %v739 = vmax.f32 %v358, %v624
  %v740 = vmax.f32 %v362, %v628
  %v741 = vmax.f32 %v364, %v630
  %v742 = vmax.f32 %v366, %v632
  %v743 = vmax.f32 %v368, %v634
  %v744 = vmax.f32 %v372, %v638
  %v745 = vmax.f32 %v374, %v640
  %v746 = vmax.f32 %v376, %v642
  %v747 = vmax.f32 %v378, %v644
  %v748 = vmax.f32 %v382, %v648
  %v749 = vmax.f32 %v384, %v650
  %v750 = vmax.f32 %v386, %v652
  %v751 = vmax.f32 %v388, %v654
  %v752 = vmax.f32 %v392, %v658
  %v753 = vmax.f32 %v394, %v660
  %v754 = vmax.f32 %v396, %v662
  %v755 = vmax.f32 %v398, %v664
  %v756 = vmax.f32 %v402, %v668
  %v757 = vmax.f32 %v404, %v670
  %v758 = vmax.f32 %v406, %v672
  %v759 = vmax.f32 %v408, %v674
  %v760 = vmax.f32 %v412, %v678
  %v761 = vmax.f32 %v414, %v680
  %v762 = vmax.f32 %v416, %v682
  %v763 = vmax.f32 %v418, %v684
  %v764 = vmax.f32 %v422, %v688
  %v765 = vmax.f32 %v424, %v690
  %v766 = vmax.f32 %v426, %v692
  %v767 = vmax.f32 %v428, %v694
  %v768 = vmax.f32 %v432, %v698
  %v769 = vmax.f32 %v434, %v700
  %v770 = vmax.f32 %v436, %v702
  %v771 = vmax.f32 %v438, %v704
  %v772 = vmax.f32 %v442, %v708
  %v773 = vmax.f32 %v444, %v710
  %v774 = vmax.f32 %v446, %v712
  %v775 = vmax.f32 %v448, %v714
  %v776 = vmax.f32 %v452, %v718
  %v777 = vmax.f32 %v454, %v720
  %v778 = vmax.f32 %v456, %v722
  %v779 = vmax.f32 %v458, %v724
  %v780 = vmax.f32 %v462, %v728
  %v781 = vmax.f32 %v464, %v730
  %v782 = vmax.f32 %v466, %v732
  %v783 = vmax.f32 %v468, %v734
  %v784 = vmax.f32 %v736, %v748
  %v785 = vmax.f32 %v737, %v749
  %v786 = vmax.f32 %v738, %v750
  %v787 = vmax.f32 %v739, %v751
  %v788 = vmax.f32 %v740, %v752
  %v789 = vmax.f32 %v741, %v753
  %v790 = vmax.f32 %v742, %v754
  %v791 = vmax.f32 %v743, %v755
  %v792 = vmax.f32 %v744, %v756
  %v793 = vmax.f32 %v745, %v757
  %v794 = vmax.f32 %v746, %v758
  %v795 = vmax.f32 %v747, %v759
  %v797 = vlaneseq
  %v798 = vshrl.u32 %v797, 7
  %v799 = vsub.s32 0, %v798
  %v800 = vrot.slane %v57, %v799
  %v801 = vlaneseq
  %v802 = vshrl.u32 %v801, 7
  %v803 = vsub.s32 1, %v802
  %v804 = vrot.slane %v57, %v803
  %v807 = vadd.f32 %v784, %v800
  %v808 = vadd.f32 %v785, %v804
  %v809 = vadd.f32 %v786, %v800
  %v810 = vadd.f32 %v787, %v804
  %v811 = vadd.f32 %v788, %v800
  %v812 = vadd.f32 %v789, %v804
  %v813 = vadd.f32 %v790, %v800
  %v814 = vadd.f32 %v791, %v804
  %v815 = vadd.f32 %v792, %v800
  %v816 = vadd.f32 %v793, %v804
  %v817 = vadd.f32 %v794, %v800
  %v818 = vadd.f32 %v795, %v804
  %v819 = vmax.f32 %v807, 0.0
  %v820 = vmax.f32 %v808, 0.0
  %v821 = vmax.f32 %v809, 0.0
  %v822 = vmax.f32 %v810, 0.0
  %v823 = vmax.f32 %v811, 0.0
  %v824 = vmax.f32 %v812, 0.0
  %v825 = vmax.f32 %v813, 0.0
  %v826 = vmax.f32 %v814, 0.0
  %v827 = vmax.f32 %v815, 0.0
  %v828 = vmax.f32 %v816, 0.0
  %v829 = vmax.f32 %v817, 0.0
  %v830 = vmax.f32 %v818, 0.0
  %v831 = vpack.c.bf16 %v821, %v819
  %v832 = vpack.c.bf16 %v822, %v820
  %v833 = vpack.c.bf16 %v825, %v823
  %v834 = vpack.c.bf16 %v826, %v824
  %v835 = vpack.c.bf16 %v829, %v827
  %v836 = vpack.c.bf16 %v830, %v828
  %837 = vst [vmem:[#allocation2] sm:$0xff] %v831
  %vm838 = vcmask 523264
  %839 = vst.msk [vmem:[#allocation2 + $0x8] sm:$0xff] %vm838, %v832
  %840 = vst [vmem:[#allocation2 + $0x10] sm:$0xff] %v833
  %841 = vst.msk [vmem:[#allocation2 + $0x18] sm:$0xff] %vm838, %v834
  %842 = vst [vmem:[#allocation2 + $0x20] sm:$0xff] %v835
  %843 = vst.msk [vmem:[#allocation2 + $0x28] sm:$0xff] %vm838, %v836
  %v844 = vmax.f32 %v760, %v772
  %v845 = vmax.f32 %v761, %v773
  %v846 = vmax.f32 %v762, %v774
  %v847 = vmax.f32 %v763, %v775
  %v848 = vmax.f32 %v764, %v776
  %v849 = vmax.f32 %v765, %v777
  %v850 = vmax.f32 %v766, %v778
  %v851 = vmax.f32 %v767, %v779
  %v852 = vmax.f32 %v768, %v780
  %v853 = vmax.f32 %v769, %v781
  %v854 = vmax.f32 %v770, %v782
  %v855 = vmax.f32 %v771, %v783
  %v856 = vadd.f32 %v844, %v800
  %v857 = vadd.f32 %v845, %v804
  %v858 = vadd.f32 %v846, %v800
  %v859 = vadd.f32 %v847, %v804
  %v860 = vadd.f32 %v848, %v800
  %v861 = vadd.f32 %v849, %v804
  %v862 = vadd.f32 %v850, %v800
  %v863 = vadd.f32 %v851, %v804
  %v864 = vadd.f32 %v852, %v800
  %v865 = vadd.f32 %v853, %v804
  %v866 = vadd.f32 %v854, %v800
  %v867 = vadd.f32 %v855, %v804
  %v868 = vmax.f32 %v856, 0.0
  %v869 = vmax.f32 %v857, 0.0
  %v870 = vmax.f32 %v858, 0.0
  %v871 = vmax.f32 %v859, 0.0
  %v872 = vmax.f32 %v860, 0.0
  %v873 = vmax.f32 %v861, 0.0
  %v874 = vmax.f32 %v862, 0.0
  %v875 = vmax.f32 %v863, 0.0
  %v876 = vmax.f32 %v864, 0.0
  %v877 = vmax.f32 %v865, 0.0
  %v878 = vmax.f32 %v866, 0.0
  %v879 = vmax.f32 %v867, 0.0
  %v880 = vpack.c.bf16 %v870, %v868
  %v881 = vpack.c.bf16 %v871, %v869
  %v882 = vpack.c.bf16 %v874, %v872
  %v883 = vpack.c.bf16 %v875, %v873
  %v884 = vpack.c.bf16 %v878, %v876
  %v885 = vpack.c.bf16 %v879, %v877
  %s886 = scalar_lea.vmem [#allocation2], 48
  %887 = vst [vmem:[%s886] sm:$0xff] %v880
  %888 = vst.msk [vmem:[%s886 + $0x8] sm:$0xff] %vm838, %v881
  %889 = vst [vmem:[%s886 + $0x10] sm:$0xff] %v882
  %890 = vst.msk [vmem:[%s886 + $0x18] sm:$0xff] %vm838, %v883
  %891 = vst [vmem:[%s886 + $0x20] sm:$0xff] %v884
  %892 = vst.msk [vmem:[%s886 + $0x28] sm:$0xff] %vm838, %v885
  %v893 = vld [vmem:[#allocation2] sm:$0xff]
  %v894 = vld [vmem:[#allocation2 + $0x8] sm:$0xff]
  %v895 = vld [vmem:[#allocation2 + $0x10] sm:$0xff]
  %v896 = vld [vmem:[#allocation2 + $0x18] sm:$0xff]
  %v897 = vld [vmem:[%s3] sm:$0xff]
  %v898 = vld [vmem:[%s3 + $0x8] sm:$0xff]
  %v899 = vld [vmem:[%s3 + $0x10] sm:$0xff]
  %v900 = vld [vmem:[%s3 + $0x18] sm:$0xff]
  %v901 = vld [vmem:[%s3 + $0x20] sm:$0xff]
  %v902 = vld [vmem:[%s3 + $0x28] sm:$0xff]
  %v903 = vld [vmem:[%s3 + $0x30] sm:$0xff]
  %v904 = vld [vmem:[%s3 + $0x38] sm:$0xff]
  %v905 = vld [vmem:[%s3 + $0x40] sm:$0xff]
  %v906 = vld [vmem:[%s3 + $0x48] sm:$0xff]
  %v907 = vld [vmem:[%s3 + $0x50] sm:$0xff]
  %v908 = vld [vmem:[%s3 + $0x58] sm:$0xff]
  %v909 = vld [vmem:[%s3 + $0x60] sm:$0xff]
  %v910 = vld [vmem:[%s3 + $0x68] sm:$0xff]
  %v911 = vld [vmem:[%s3 + $0x70] sm:$0xff]
  %v912 = vld [vmem:[%s3 + $0x78] sm:$0xff]
  %v913 = vld [vmem:[%s3 + $0x80] sm:$0xff]
  %v914 = vld [vmem:[%s3 + $0x88] sm:$0xff]
  %v915 = vld [vmem:[%s3 + $0x90] sm:$0xff]
  %v916 = vld [vmem:[%s3 + $0x98] sm:$0xff]
  %v917 = vld [vmem:[%s3 + $0xa0] sm:$0xff]
  %v918 = vld [vmem:[%s3 + $0xa8] sm:$0xff]
  %v919 = vld [vmem:[%s3 + $0xb0] sm:$0xff]
  %v920 = vld [vmem:[%s3 + $0xb8] sm:$0xff]
  %v921 = vld [vmem:[%s886] sm:$0xff]
  %v922 = vld [vmem:[%s886 + $0x8] sm:$0xff]
  %v923 = vld [vmem:[%s886 + $0x10] sm:$0xff]
  %v924 = vld [vmem:[%s886 + $0x18] sm:$0xff]
  %s925 = scalar_lea.vmem %s3, 192
  %v926 = vld [vmem:[%s925] sm:$0xff]
  %v927 = vld [vmem:[%s925 + $0x8] sm:$0xff]
  %v928 = vld [vmem:[%s925 + $0x10] sm:$0xff]
  %v929 = vld [vmem:[%s925 + $0x18] sm:$0xff]
  %v930 = vld [vmem:[%s925 + $0x20] sm:$0xff]
  %v931 = vld [vmem:[%s925 + $0x28] sm:$0xff]
  %v932 = vld [vmem:[%s925 + $0x30] sm:$0xff]
  %v933 = vld [vmem:[%s925 + $0x38] sm:$0xff]
  %v934 = vld [vmem:[%s925 + $0x40] sm:$0xff]
  %v935 = vld [vmem:[%s925 + $0x48] sm:$0xff]
  %v936 = vld [vmem:[%s925 + $0x50] sm:$0xff]
  %v937 = vld [vmem:[%s925 + $0x58] sm:$0xff]
  %v938 = vld [vmem:[%s925 + $0x60] sm:$0xff]
  %v939 = vld [vmem:[%s925 + $0x68] sm:$0xff]
  %v940 = vld [vmem:[%s925 + $0x70] sm:$0xff]
  %v941 = vld [vmem:[%s925 + $0x78] sm:$0xff]
  %v942 = vld [vmem:[%s925 + $0x80] sm:$0xff]
  %v943 = vld [vmem:[%s925 + $0x88] sm:$0xff]
  %v944 = vld [vmem:[%s925 + $0x90] sm:$0xff]
  %v945 = vld [vmem:[%s925 + $0x98] sm:$0xff]
  %v946 = vld [vmem:[%s925 + $0xa0] sm:$0xff]
  %v947 = vld [vmem:[%s925 + $0xa8] sm:$0xff]
  %v948 = vld [vmem:[%s925 + $0xb0] sm:$0xff]
  %v949 = vld [vmem:[%s925 + $0xb8] sm:$0xff]
  %v974 = vunpack.c.l.b16 %v926
  %v975 = vunpack.c.h.b16 %v926
  %v976 = vunpack.c.l.b16 %v927
  %v977 = vunpack.c.h.b16 %v927
  %v978 = vunpack.c.l.b16 %v928
  %v979 = vunpack.c.h.b16 %v928
  %v980 = vunpack.c.l.b16 %v929
  %v981 = vunpack.c.h.b16 %v929
  %v982 = vunpack.c.l.b16 %v930
  %v983 = vunpack.c.h.b16 %v930
  %v984 = vunpack.c.l.b16 %v931
  %v985 = vunpack.c.h.b16 %v931
  %v986 = vunpack.c.l.b16 %v932
  %v987 = vunpack.c.h.b16 %v932
  %v988 = vunpack.c.l.b16 %v933
  %v989 = vunpack.c.h.b16 %v933
  %v990 = vunpack.c.l.b16 %v934
  %v991 = vunpack.c.h.b16 %v934
  %v992 = vunpack.c.l.b16 %v935
  %v993 = vunpack.c.h.b16 %v935
  %v994 = vunpack.c.l.b16 %v936
  %v995 = vunpack.c.h.b16 %v936
  %v996 = vunpack.c.l.b16 %v937
  %v997 = vunpack.c.h.b16 %v937
  %v998 = vunpack.c.l.b16 %v938
  %v999 = vunpack.c.h.b16 %v938
  %v1000 = vunpack.c.l.b16 %v939
  %v1001 = vunpack.c.h.b16 %v939
  %v1002 = vunpack.c.l.b16 %v940
  %v1003 = vunpack.c.h.b16 %v940
  %v1004 = vunpack.c.l.b16 %v941
  %v1005 = vunpack.c.h.b16 %v941
  %v1006 = vunpack.c.l.b16 %v942
  %v1007 = vunpack.c.h.b16 %v942
  %v1008 = vunpack.c.l.b16 %v943
  %v1009 = vunpack.c.h.b16 %v943
  %v1010 = vunpack.c.l.b16 %v944
  %v1011 = vunpack.c.h.b16 %v944
  %v1012 = vunpack.c.l.b16 %v945
  %v1013 = vunpack.c.h.b16 %v945
  %v1014 = vunpack.c.l.b16 %v946
  %v1015 = vunpack.c.h.b16 %v946
  %v1016 = vunpack.c.l.b16 %v947
  %v1017 = vunpack.c.h.b16 %v947
  %v1018 = vunpack.c.l.b16 %v948
  %v1019 = vunpack.c.h.b16 %v948
  %v1020 = vunpack.c.l.b16 %v949
  %v1021 = vunpack.c.h.b16 %v949
  %v1022 = vpack.c.b16 %v976, %v974
  %v1023 = vpack.c.b16 %v977, %v975
  %v1024 = vpack.c.b16 %v980, %v978
  %v1025 = vpack.c.b16 %v981, %v979
  %v1026 = vpack.c.b16 %v984, %v982
  %v1027 = vpack.c.b16 %v985, %v983
  %v1028 = vpack.c.b16 %v988, %v986
  %v1029 = vpack.c.b16 %v989, %v987
  %v1030 = vpack.c.b16 %v992, %v990
  %v1031 = vpack.c.b16 %v993, %v991
  %v1032 = vpack.c.b16 %v996, %v994
  %v1033 = vpack.c.b16 %v997, %v995
  %v1034 = vpack.c.b16 %v1000, %v998
  %v1035 = vpack.c.b16 %v1001, %v999
  %v1036 = vpack.c.b16 %v1004, %v1002
  %v1037 = vpack.c.b16 %v1005, %v1003
  %v1038 = vpack.c.b16 %v1008, %v1006
  %v1039 = vpack.c.b16 %v1009, %v1007
  %v1040 = vpack.c.b16 %v1012, %v1010
  %v1041 = vpack.c.b16 %v1013, %v1011
  %v1042 = vpack.c.b16 %v1016, %v1014
  %v1043 = vpack.c.b16 %v1017, %v1015
  %v1044 = vpack.c.b16 %v1020, %v1018
  %v1045 = vpack.c.b16 %v1021, %v1019
  %v1071 = vsel %vm838, %v922, 0
  %v1074 = vsel %vm838, %v924, 0
  %1076 = vmatprep.subr.bf16.mxu0 %v1023
  %1077 = vmatpush1.bf16.msra.mxu0 %v1022
  %1078 = vmatprep.subr.bf16.mxu0 %v1025
  %1079 = vmatpush1.bf16.msra.mxu0 %v1024
  %1080 = vmatprep.subr.bf16.mxu0 %v1027
  %1081 = vmatpush1.bf16.msra.mxu0 %v1026
  %1082 = vmatprep.subr.bf16.mxu0 %v1029
  %1083 = vmatpush1.bf16.msra.mxu0 %v1028
  %1084 = vmatprep.subr.bf16.mxu0 %v1031
  %1085 = vmatpush1.bf16.msra.mxu0 %v1030
  %1086 = vmatprep.subr.bf16.mxu0 %v1033
  %1087 = vmatpush1.bf16.msra.mxu0 %v1032
  %1088 = vmatprep.subr.bf16.mxu0 %v1035
  %1089 = vmatpush1.bf16.msra.mxu0 %v1034
  %1090 = vmatprep.subr.bf16.mxu0 %v1037
  %1091 = vmatpush1.bf16.msra.mxu0 %v1036
  %1092 = vmatprep.subr.bf16.mxu0 %v1039
  %1093 = vmatpush1.bf16.msra.mxu0 %v1038
  %1094 = vmatprep.subr.bf16.mxu0 %v1041
  %1095 = vmatpush1.bf16.msra.mxu0 %v1040
  %1096 = vmatprep.subr.bf16.mxu0 %v1043
  %1097 = vmatpush1.bf16.msra.mxu0 %v1042
  %1098 = vmatprep.subr.bf16.mxu0 %v1045
  %1099 = vmatpush1.bf16.msra.mxu0 %v1044
  %1100 = vmatprep.subr.bf16.mxu0 0
  %1101 = vmatpush1.bf16.msra.mxu0 0
  %1102 = vmatprep.subr.bf16.mxu0 0
  %1103 = vmatpush1.bf16.msra.mxu0 0
  %1104 = vmatprep.subr.bf16.mxu0 0
  %1105 = vmatpush1.bf16.msra.mxu0 0
  %1106 = vmatprep.subr.bf16.mxu0 0
  %1107 = vmatpush1.bf16.msra.mxu0 0
  %1108 = vmatprep.mubr.bf16.mxu0 %v1071
  %1109 = vmatmul.mubr.bf16.gmra.mrb[0].mxu0 %v921
  %v1110 = vpop.f32.mrb[0].mxu0
  %v1111 = vadd.f32 0.0, %v1110
  %v1112 = vpop.f32.mrb[0].mxu0
  %v1113 = vadd.f32 0.0, %v1112
  %v1114 = vpop.f32.mrb[0].mxu0
  %v1115 = vadd.f32 0.0, %v1114
  %v1116 = vpop.f32.mrb[0].mxu0
  %v1117 = vadd.f32 0.0, %v1116
  %1118 = vmatprep.mubr.bf16.mxu0 %v1074
  %1119 = vmatmul.mubr.bf16.gmra.mrb[0].mxu0 %v923
  %v1120 = vpop.f32.mrb[0].mxu0
  %v1121 = vadd.f32 0.0, %v1120
  %v1122 = vpop.f32.mrb[0].mxu0
  %v1123 = vadd.f32 0.0, %v1122
  %v1124 = vpop.f32.mrb[0].mxu0
  %v1125 = vadd.f32 0.0, %v1124
  %v1126 = vpop.f32.mrb[0].mxu0
  %v1127 = vadd.f32 0.0, %v1126
  %1128 = vdwg.mxu0
  %v1153 = vunpack.c.l.b16 %v897
  %v1154 = vunpack.c.h.b16 %v897
  %v1155 = vunpack.c.l.b16 %v898
  %v1156 = vunpack.c.h.b16 %v898
  %v1157 = vunpack.c.l.b16 %v899
  %v1158 = vunpack.c.h.b16 %v899
  %v1159 = vunpack.c.l.b16 %v900
  %v1160 = vunpack.c.h.b16 %v900
  %v1161 = vunpack.c.l.b16 %v901
  %v1162 = vunpack.c.h.b16 %v901
  %v1163 = vunpack.c.l.b16 %v902
  %v1164 = vunpack.c.h.b16 %v902
  %v1165 = vunpack.c.l.b16 %v903
  %v1166 = vunpack.c.h.b16 %v903
  %v1167 = vunpack.c.l.b16 %v904
  %v1168 = vunpack.c.h.b16 %v904
  %v1169 = vunpack.c.l.b16 %v905
  %v1170 = vunpack.c.h.b16 %v905
  %v1171 = vunpack.c.l.b16 %v906
  %v1172 = vunpack.c.h.b16 %v906
  %v1173 = vunpack.c.l.b16 %v907
  %v1174 = vunpack.c.h.b16 %v907
  %v1175 = vunpack.c.l.b16 %v908
  %v1176 = vunpack.c.h.b16 %v908
  %v1177 = vunpack.c.l.b16 %v909
  %v1178 = vunpack.c.h.b16 %v909
  %v1179 = vunpack.c.l.b16 %v910
  %v1180 = vunpack.c.h.b16 %v910
  %v1181 = vunpack.c.l.b16 %v911
  %v1182 = vunpack.c.h.b16 %v911
  %v1183 = vunpack.c.l.b16 %v912
  %v1184 = vunpack.c.h.b16 %v912
  %v1185 = vunpack.c.l.b16 %v913
  %v1186 = vunpack.c.h.b16 %v913
  %v1187 = vunpack.c.l.b16 %v914
  %v1188 = vunpack.c.h.b16 %v914
  %v1189 = vunpack.c.l.b16 %v915
  %v1190 = vunpack.c.h.b16 %v915
  %v1191 = vunpack.c.l.b16 %v916
  %v1192 = vunpack.c.h.b16 %v916
  %v1193 = vunpack.c.l.b16 %v917
  %v1194 = vunpack.c.h.b16 %v917
  %v1195 = vunpack.c.l.b16 %v918
  %v1196 = vunpack.c.h.b16 %v918
  %v1197 = vunpack.c.l.b16 %v919
  %v1198 = vunpack.c.h.b16 %v919
  %v1199 = vunpack.c.l.b16 %v920
  %v1200 = vunpack.c.h.b16 %v920
  %v1201 = vpack.c.b16 %v1155, %v1153
  %v1202 = vpack.c.b16 %v1156, %v1154
  %v1203 = vpack.c.b16 %v1159, %v1157
  %v1204 = vpack.c.b16 %v1160, %v1158
  %v1205 = vpack.c.b16 %v1163, %v1161
  %v1206 = vpack.c.b16 %v1164, %v1162
  %v1207 = vpack.c.b16 %v1167, %v1165
  %v1208 = vpack.c.b16 %v1168, %v1166
  %v1209 = vpack.c.b16 %v1171, %v1169
  %v1210 = vpack.c.b16 %v1172, %v1170
  %v1211 = vpack.c.b16 %v1175, %v1173
  %v1212 = vpack.c.b16 %v1176, %v1174
  %v1213 = vpack.c.b16 %v1179, %v1177
  %v1214 = vpack.c.b16 %v1180, %v1178
  %v1215 = vpack.c.b16 %v1183, %v1181
  %v1216 = vpack.c.b16 %v1184, %v1182
  %v1217 = vpack.c.b16 %v1187, %v1185
  %v1218 = vpack.c.b16 %v1188, %v1186
  %v1219 = vpack.c.b16 %v1191, %v1189
  %v1220 = vpack.c.b16 %v1192, %v1190
  %v1221 = vpack.c.b16 %v1195, %v1193
  %v1222 = vpack.c.b16 %v1196, %v1194
  %v1223 = vpack.c.b16 %v1199, %v1197
  %v1224 = vpack.c.b16 %v1200, %v1198
  %v1250 = vsel %vm838, %v894, 0
  %v1253 = vsel %vm838, %v896, 0
  %1255 = vmatprep.subr.bf16.mxu0 %v1202
  %1256 = vmatpush1.bf16.msra.mxu0 %v1201
  %1257 = vmatprep.subr.bf16.mxu0 %v1204
  %1258 = vmatpush1.bf16.msra.mxu0 %v1203
  %1259 = vmatprep.subr.bf16.mxu0 %v1206
  %1260 = vmatpush1.bf16.msra.mxu0 %v1205
  %1261 = vmatprep.subr.bf16.mxu0 %v1208
  %1262 = vmatpush1.bf16.msra.mxu0 %v1207
  %1263 = vmatprep.subr.bf16.mxu0 %v1210
  %1264 = vmatpush1.bf16.msra.mxu0 %v1209
  %1265 = vmatprep.subr.bf16.mxu0 %v1212
  %1266 = vmatpush1.bf16.msra.mxu0 %v1211
  %1267 = vmatprep.subr.bf16.mxu0 %v1214
  %1268 = vmatpush1.bf16.msra.mxu0 %v1213
  %1269 = vmatprep.subr.bf16.mxu0 %v1216
  %1270 = vmatpush1.bf16.msra.mxu0 %v1215
  %1271 = vmatprep.subr.bf16.mxu0 %v1218
  %1272 = vmatpush1.bf16.msra.mxu0 %v1217
  %1273 = vmatprep.subr.bf16.mxu0 %v1220
  %1274 = vmatpush1.bf16.msra.mxu0 %v1219
  %1275 = vmatprep.subr.bf16.mxu0 %v1222
  %1276 = vmatpush1.bf16.msra.mxu0 %v1221
  %1277 = vmatprep.subr.bf16.mxu0 %v1224
  %1278 = vmatpush1.bf16.msra.mxu0 %v1223
  %1279 = vmatprep.subr.bf16.mxu0 0
  %1280 = vmatpush1.bf16.msra.mxu0 0
  %1281 = vmatprep.subr.bf16.mxu0 0
  %1282 = vmatpush1.bf16.msra.mxu0 0
  %1283 = vmatprep.subr.bf16.mxu0 0
  %1284 = vmatpush1.bf16.msra.mxu0 0
  %1285 = vmatprep.subr.bf16.mxu0 0
  %1286 = vmatpush1.bf16.msra.mxu0 0
  %1287 = vmatprep.mubr.bf16.mxu0 %v1250
  %1288 = vmatmul.mubr.bf16.gmra.mrb[0].mxu0 %v893
  %v1289 = vpop.f32.mrb[0].mxu0
  %v1290 = vadd.f32 %v1111, %v1289
  %v1291 = vpop.f32.mrb[0].mxu0
  %v1292 = vadd.f32 %v1113, %v1291
  %v1293 = vpop.f32.mrb[0].mxu0
  %v1294 = vadd.f32 %v1115, %v1293
  %v1295 = vpop.f32.mrb[0].mxu0
  %v1296 = vadd.f32 %v1117, %v1295
  %1297 = vmatprep.mubr.bf16.mxu0 %v1253
  %1298 = vmatmul.mubr.bf16.gmra.mrb[0].mxu0 %v895
  %v1299 = vpop.f32.mrb[0].mxu0
  %v1300 = vadd.f32 %v1121, %v1299
  %v1301 = vpop.f32.mrb[0].mxu0
  %v1302 = vadd.f32 %v1123, %v1301
  %v1303 = vpop.f32.mrb[0].mxu0
  %v1304 = vadd.f32 %v1125, %v1303
  %v1305 = vpop.f32.mrb[0].mxu0
  %v1306 = vadd.f32 %v1127, %v1305
  %1307 = vdwg.mxu0
  %v1308 = vld [vmem:[#allocation2] sm:$0xf0]
  %v1309 = vld [vmem:[#allocation2 + $0x8] sm:$0xf0]
  %v1310 = vld [vmem:[#allocation2 + $0x10] sm:$0xff]
  %v1311 = vld [vmem:[#allocation2 + $0x18] sm:$0xff]
  %v1312 = vld [vmem:[#allocation2 + $0x20] sm:$0xf]
  %v1313 = vld [vmem:[#allocation2 + $0x28] sm:$0xf]
  %s1314 = scalar_lea.vmem %s3, 384
  %v1315 = vld [vmem:[%s1314] sm:$0xff]
  %v1316 = vld [vmem:[%s1314 + $0x8] sm:$0xff]
  %v1317 = vld [vmem:[%s1314 + $0x10] sm:$0xff]
  %v1318 = vld [vmem:[%s1314 + $0x18] sm:$0xff]
  %v1319 = vld [vmem:[%s1314 + $0x20] sm:$0xff]
  %v1320 = vld [vmem:[%s1314 + $0x28] sm:$0xff]
  %v1321 = vld [vmem:[%s1314 + $0x30] sm:$0xff]
  %v1322 = vld [vmem:[%s1314 + $0x38] sm:$0xff]
  %v1323 = vld [vmem:[%s1314 + $0x40] sm:$0xff]
  %v1324 = vld [vmem:[%s1314 + $0x48] sm:$0xff]
  %v1325 = vld [vmem:[%s1314 + $0x50] sm:$0xff]
  %v1326 = vld [vmem:[%s1314 + $0x58] sm:$0xff]
  %v1327 = vld [vmem:[%s1314 + $0x60] sm:$0xff]
  %v1328 = vld [vmem:[%s1314 + $0x68] sm:$0xff]
  %v1329 = vld [vmem:[%s1314 + $0x70] sm:$0xff]
  %v1330 = vld [vmem:[%s1314 + $0x78] sm:$0xff]
  %v1331 = vld [vmem:[%s1314 + $0x80] sm:$0xff]
  %v1332 = vld [vmem:[%s1314 + $0x88] sm:$0xff]
  %v1333 = vld [vmem:[%s1314 + $0x90] sm:$0xff]
  %v1334 = vld [vmem:[%s1314 + $0x98] sm:$0xff]
  %v1335 = vld [vmem:[%s1314 + $0xa0] sm:$0xff]
  %v1336 = vld [vmem:[%s1314 + $0xa8] sm:$0xff]
  %v1337 = vld [vmem:[%s1314 + $0xb0] sm:$0xff]
  %v1338 = vld [vmem:[%s1314 + $0xb8] sm:$0xff]
  %vm1345 = vcmask 1043456
  %v1346 = vrot.slane %v1308, 4
  %v1347 = vrot.slane %v1310, 4
  %v1348 = vsel %vm1345, %v1346, %v1347
  %v1349 = vrot.slane %v1309, 4
  %v1350 = vrot.slane %v1311, 4
  %v1351 = vsel %vm1345, %v1349, %v1350
  %v1352 = vrot.slane %v1312, 4
  %v1353 = vsel %vm1345, %v1347, %v1352
  %v1354 = vrot.slane %v1313, 4
  %v1355 = vsel %vm1345, %v1350, %v1354
  %v1382 = vunpack.c.l.b16 %v1315
  %v1383 = vunpack.c.h.b16 %v1315
  %v1384 = vunpack.c.l.b16 %v1316
  %v1385 = vunpack.c.h.b16 %v1316
  %v1386 = vunpack.c.l.b16 %v1317
  %v1387 = vunpack.c.h.b16 %v1317
  %v1388 = vunpack.c.l.b16 %v1318
  %v1389 = vunpack.c.h.b16 %v1318
  %v1390 = vunpack.c.l.b16 %v1319
  %v1391 = vunpack.c.h.b16 %v1319
  %v1392 = vunpack.c.l.b16 %v1320
  %v1393 = vunpack.c.h.b16 %v1320
  %v1394 = vunpack.c.l.b16 %v1321
  %v1395 = vunpack.c.h.b16 %v1321
  %v1396 = vunpack.c.l.b16 %v1322
  %v1397 = vunpack.c.h.b16 %v1322
  %v1398 = vunpack.c.l.b16 %v1323
  %v1399 = vunpack.c.h.b16 %v1323
  %v1400 = vunpack.c.l.b16 %v1324
  %v1401 = vunpack.c.h.b16 %v1324
  %v1402 = vunpack.c.l.b16 %v1325
  %v1403 = vunpack.c.h.b16 %v1325
  %v1404 = vunpack.c.l.b16 %v1326
  %v1405 = vunpack.c.h.b16 %v1326
  %v1406 = vunpack.c.l.b16 %v1327
  %v1407 = vunpack.c.h.b16 %v1327
  %v1408 = vunpack.c.l.b16 %v1328
  %v1409 = vunpack.c.h.b16 %v1328
  %v1410 = vunpack.c.l.b16 %v1329
  %v1411 = vunpack.c.h.b16 %v1329
  %v1412 = vunpack.c.l.b16 %v1330
  %v1413 = vunpack.c.h.b16 %v1330
  %v1414 = vunpack.c.l.b16 %v1331
  %v1415 = vunpack.c.h.b16 %v1331
  %v1416 = vunpack.c.l.b16 %v1332
  %v1417 = vunpack.c.h.b16 %v1332
  %v1418 = vunpack.c.l.b16 %v1333
  %v1419 = vunpack.c.h.b16 %v1333
  %v1420 = vunpack.c.l.b16 %v1334
  %v1421 = vunpack.c.h.b16 %v1334
  %v1422 = vunpack.c.l.b16 %v1335
  %v1423 = vunpack.c.h.b16 %v1335
  %v1424 = vunpack.c.l.b16 %v1336
  %v1425 = vunpack.c.h.b16 %v1336
  %v1426 = vunpack.c.l.b16 %v1337
  %v1427 = vunpack.c.h.b16 %v1337
  %v1428 = vunpack.c.l.b16 %v1338
  %v1429 = vunpack.c.h.b16 %v1338
  %v1430 = vpack.c.b16 %v1384, %v1382
  %v1431 = vpack.c.b16 %v1385, %v1383
  %v1432 = vpack.c.b16 %v1388, %v1386
  %v1433 = vpack.c.b16 %v1389, %v1387
  %v1434 = vpack.c.b16 %v1392, %v1390
  %v1435 = vpack.c.b16 %v1393, %v1391
  %v1436 = vpack.c.b16 %v1396, %v1394
  %v1437 = vpack.c.b16 %v1397, %v1395
  %v1438 = vpack.c.b16 %v1400, %v1398
  %v1439 = vpack.c.b16 %v1401, %v1399
  %v1440 = vpack.c.b16 %v1404, %v1402
  %v1441 = vpack.c.b16 %v1405, %v1403
  %v1442 = vpack.c.b16 %v1408, %v1406
  %v1443 = vpack.c.b16 %v1409, %v1407
  %v1444 = vpack.c.b16 %v1412, %v1410
  %v1445 = vpack.c.b16 %v1413, %v1411
  %v1446 = vpack.c.b16 %v1416, %v1414
  %v1447 = vpack.c.b16 %v1417, %v1415
  %v1448 = vpack.c.b16 %v1420, %v1418
  %v1449 = vpack.c.b16 %v1421, %v1419
  %v1450 = vpack.c.b16 %v1424, %v1422
  %v1451 = vpack.c.b16 %v1425, %v1423
  %v1452 = vpack.c.b16 %v1428, %v1426
  %v1453 = vpack.c.b16 %v1429, %v1427
  %v1479 = vsel %vm838, %v1351, 0
  %v1482 = vsel %vm838, %v1355, 0
  %1484 = vmatprep.subr.bf16.mxu0 %v1431
  %1485 = vmatpush1.bf16.msra.mxu0 %v1430
  %1486 = vmatprep.subr.bf16.mxu0 %v1433
  %1487 = vmatpush1.bf16.msra.mxu0 %v1432
  %1488 = vmatprep.subr.bf16.mxu0 %v1435
  %1489 = vmatpush1.bf16.msra.mxu0 %v1434
  %1490 = vmatprep.subr.bf16.mxu0 %v1437
  %1491 = vmatpush1.bf16.msra.mxu0 %v1436
  %1492 = vmatprep.subr.bf16.mxu0 %v1439
  %1493 = vmatpush1.bf16.msra.mxu0 %v1438
  %1494 = vmatprep.subr.bf16.mxu0 %v1441
  %1495 = vmatpush1.bf16.msra.mxu0 %v1440
  %1496 = vmatprep.subr.bf16.mxu0 %v1443
  %1497 = vmatpush1.bf16.msra.mxu0 %v1442
  %1498 = vmatprep.subr.bf16.mxu0 %v1445
  %1499 = vmatpush1.bf16.msra.mxu0 %v1444
  %1500 = vmatprep.subr.bf16.mxu0 %v1447
  %1501 = vmatpush1.bf16.msra.mxu0 %v1446
  %1502 = vmatprep.subr.bf16.mxu0 %v1449
  %1503 = vmatpush1.bf16.msra.mxu0 %v1448
  %1504 = vmatprep.subr.bf16.mxu0 %v1451
  %1505 = vmatpush1.bf16.msra.mxu0 %v1450
  %1506 = vmatprep.subr.bf16.mxu0 %v1453
  %1507 = vmatpush1.bf16.msra.mxu0 %v1452
  %1508 = vmatprep.subr.bf16.mxu0 0
  %1509 = vmatpush1.bf16.msra.mxu0 0
  %1510 = vmatprep.subr.bf16.mxu0 0
  %1511 = vmatpush1.bf16.msra.mxu0 0
  %1512 = vmatprep.subr.bf16.mxu0 0
  %1513 = vmatpush1.bf16.msra.mxu0 0
  %1514 = vmatprep.subr.bf16.mxu0 0
  %1515 = vmatpush1.bf16.msra.mxu0 0
  %1516 = vmatprep.mubr.bf16.mxu0 %v1479
  %1517 = vmatmul.mubr.bf16.gmra.mrb[0].mxu0 %v1348
  %v1518 = vpop.f32.mrb[0].mxu0
  %v1519 = vadd.f32 0.0, %v1518
  %v1520 = vpop.f32.mrb[0].mxu0
  %v1521 = vadd.f32 0.0, %v1520
  %v1522 = vpop.f32.mrb[0].mxu0
  %v1523 = vadd.f32 0.0, %v1522
  %v1524 = vpop.f32.mrb[0].mxu0
  %v1525 = vadd.f32 0.0, %v1524
  %1526 = vmatprep.mubr.bf16.mxu0 %v1482
  %1527 = vmatmul.mubr.bf16.gmra.mrb[0].mxu0 %v1353
  %v1528 = vpop.f32.mrb[0].mxu0
  %v1529 = vadd.f32 0.0, %v1528
  %v1530 = vpop.f32.mrb[0].mxu0
  %v1531 = vadd.f32 0.0, %v1530
  %v1532 = vpop.f32.mrb[0].mxu0
  %v1533 = vadd.f32 0.0, %v1532
  %v1534 = vpop.f32.mrb[0].mxu0
  %v1535 = vadd.f32 0.0, %v1534
  %1536 = vdwg.mxu0
  %v1537 = vadd.f32 %v1290, %v1519
  %v1538 = vadd.f32 %v1292, %v1521
  %v1539 = vadd.f32 %v1294, %v1523
  %v1540 = vadd.f32 %v1296, %v1525
  %v1541 = vadd.f32 %v1300, %v1529
  %v1542 = vadd.f32 %v1302, %v1531
  %v1543 = vadd.f32 %v1304, %v1533
  %v1544 = vadd.f32 %v1306, %v1535
  %v1545 = vld [vmem:[%s886] sm:$0xf0]
  %v1546 = vld [vmem:[%s886 + $0x8] sm:$0xf0]
  %v1547 = vld [vmem:[%s886 + $0x10] sm:$0xff]
  %v1548 = vld [vmem:[%s886 + $0x18] sm:$0xff]
  %v1549 = vld [vmem:[%s886 + $0x20] sm:$0xf]
  %v1550 = vld [vmem:[%s886 + $0x28] sm:$0xf]
  %s1551 = scalar_lea.vmem %s3, 576
  %v1552 = vld [vmem:[%s1551] sm:$0xff]
  %v1553 = vld [vmem:[%s1551 + $0x8] sm:$0xff]
  %v1554 = vld [vmem:[%s1551 + $0x10] sm:$0xff]
  %v1555 = vld [vmem:[%s1551 + $0x18] sm:$0xff]
  %v1556 = vld [vmem:[%s1551 + $0x20] sm:$0xff]
  %v1557 = vld [vmem:[%s1551 + $0x28] sm:$0xff]
  %v1558 = vld [vmem:[%s1551 + $0x30] sm:$0xff]
  %v1559 = vld [vmem:[%s1551 + $0x38] sm:$0xff]
  %v1560 = vld [vmem:[%s1551 + $0x40] sm:$0xff]
  %v1561 = vld [vmem:[%s1551 + $0x48] sm:$0xff]
  %v1562 = vld [vmem:[%s1551 + $0x50] sm:$0xff]
  %v1563 = vld [vmem:[%s1551 + $0x58] sm:$0xff]
  %v1564 = vld [vmem:[%s1551 + $0x60] sm:$0xff]
  %v1565 = vld [vmem:[%s1551 + $0x68] sm:$0xff]
  %v1566 = vld [vmem:[%s1551 + $0x70] sm:$0xff]
  %v1567 = vld [vmem:[%s1551 + $0x78] sm:$0xff]
  %v1568 = vld [vmem:[%s1551 + $0x80] sm:$0xff]
  %v1569 = vld [vmem:[%s1551 + $0x88] sm:$0xff]
  %v1570 = vld [vmem:[%s1551 + $0x90] sm:$0xff]
  %v1571 = vld [vmem:[%s1551 + $0x98] sm:$0xff]
  %v1572 = vld [vmem:[%s1551 + $0xa0] sm:$0xff]
  %v1573 = vld [vmem:[%s1551 + $0xa8] sm:$0xff]
  %v1574 = vld [vmem:[%s1551 + $0xb0] sm:$0xff]
  %v1575 = vld [vmem:[%s1551 + $0xb8] sm:$0xff]
  %v1582 = vrot.slane %v1545, 4
  %v1583 = vrot.slane %v1547, 4
  %v1584 = vsel %vm1345, %v1582, %v1583
  %v1585 = vrot.slane %v1546, 4
  %v1586 = vrot.slane %v1548, 4
  %v1587 = vsel %vm1345, %v1585, %v1586
  %v1588 = vrot.slane %v1549, 4
  %v1589 = vsel %vm1345, %v1583, %v1588
  %v1590 = vrot.slane %v1550, 4
  %v1591 = vsel %vm1345, %v1586, %v1590
  %v1618 = vunpack.c.l.b16 %v1552
  %v1619 = vunpack.c.h.b16 %v1552
  %v1620 = vunpack.c.l.b16 %v1553
  %v1621 = vunpack.c.h.b16 %v1553
  %v1622 = vunpack.c.l.b16 %v1554
  %v1623 = vunpack.c.h.b16 %v1554
  %v1624 = vunpack.c.l.b16 %v1555
  %v1625 = vunpack.c.h.b16 %v1555
  %v1626 = vunpack.c.l.b16 %v1556
  %v1627 = vunpack.c.h.b16 %v1556
  %v1628 = vunpack.c.l.b16 %v1557
  %v1629 = vunpack.c.h.b16 %v1557
  %v1630 = vunpack.c.l.b16 %v1558
  %v1631 = vunpack.c.h.b16 %v1558
  %v1632 = vunpack.c.l.b16 %v1559
  %v1633 = vunpack.c.h.b16 %v1559
  %v1634 = vunpack.c.l.b16 %v1560
  %v1635 = vunpack.c.h.b16 %v1560
  %v1636 = vunpack.c.l.b16 %v1561
  %v1637 = vunpack.c.h.b16 %v1561
  %v1638 = vunpack.c.l.b16 %v1562
  %v1639 = vunpack.c.h.b16 %v1562
  %v1640 = vunpack.c.l.b16 %v1563
  %v1641 = vunpack.c.h.b16 %v1563
  %v1642 = vunpack.c.l.b16 %v1564
  %v1643 = vunpack.c.h.b16 %v1564
  %v1644 = vunpack.c.l.b16 %v1565
  %v1645 = vunpack.c.h.b16 %v1565
  %v1646 = vunpack.c.l.b16 %v1566
  %v1647 = vunpack.c.h.b16 %v1566
  %v1648 = vunpack.c.l.b16 %v1567
  %v1649 = vunpack.c.h.b16 %v1567
  %v1650 = vunpack.c.l.b16 %v1568
  %v1651 = vunpack.c.h.b16 %v1568
  %v1652 = vunpack.c.l.b16 %v1569
  %v1653 = vunpack.c.h.b16 %v1569
  %v1654 = vunpack.c.l.b16 %v1570
  %v1655 = vunpack.c.h.b16 %v1570
  %v1656 = vunpack.c.l.b16 %v1571
  %v1657 = vunpack.c.h.b16 %v1571
  %v1658 = vunpack.c.l.b16 %v1572
  %v1659 = vunpack.c.h.b16 %v1572
  %v1660 = vunpack.c.l.b16 %v1573
  %v1661 = vunpack.c.h.b16 %v1573
  %v1662 = vunpack.c.l.b16 %v1574
  %v1663 = vunpack.c.h.b16 %v1574
  %v1664 = vunpack.c.l.b16 %v1575
  %v1665 = vunpack.c.h.b16 %v1575
  %v1666 = vpack.c.b16 %v1620, %v1618
  %v1667 = vpack.c.b16 %v1621, %v1619
  %v1668 = vpack.c.b16 %v1624, %v1622
  %v1669 = vpack.c.b16 %v1625, %v1623
  %v1670 = vpack.c.b16 %v1628, %v1626
  %v1671 = vpack.c.b16 %v1629, %v1627
  %v1672 = vpack.c.b16 %v1632, %v1630
  %v1673 = vpack.c.b16 %v1633, %v1631
  %v1674 = vpack.c.b16 %v1636, %v1634
  %v1675 = vpack.c.b16 %v1637, %v1635
  %v1676 = vpack.c.b16 %v1640, %v1638
  %v1677 = vpack.c.b16 %v1641, %v1639
  %v1678 = vpack.c.b16 %v1644, %v1642
  %v1679 = vpack.c.b16 %v1645, %v1643
  %v1680 = vpack.c.b16 %v1648, %v1646
  %v1681 = vpack.c.b16 %v1649, %v1647
  %v1682 = vpack.c.b16 %v1652, %v1650
  %v1683 = vpack.c.b16 %v1653, %v1651
  %v1684 = vpack.c.b16 %v1656, %v1654
  %v1685 = vpack.c.b16 %v1657, %v1655
  %v1686 = vpack.c.b16 %v1660, %v1658
  %v1687 = vpack.c.b16 %v1661, %v1659
  %v1688 = vpack.c.b16 %v1664, %v1662
  %v1689 = vpack.c.b16 %v1665, %v1663
  %v1715 = vsel %vm838, %v1587, 0
  %v1718 = vsel %vm838, %v1591, 0
  %1720 = vmatprep.subr.bf16.mxu0 %v1667
  %1721 = vmatpush1.bf16.msra.mxu0 %v1666
  %1722 = vmatprep.subr.bf16.mxu0 %v1669
  %1723 = vmatpush1.bf16.msra.mxu0 %v1668
  %1724 = vmatprep.subr.bf16.mxu0 %v1671
  %1725 = vmatpush1.bf16.msra.mxu0 %v1670
  %1726 = vmatprep.subr.bf16.mxu0 %v1673
  %1727 = vmatpush1.bf16.msra.mxu0 %v1672
  %1728 = vmatprep.subr.bf16.mxu0 %v1675
  %1729 = vmatpush1.bf16.msra.mxu0 %v1674
  %1730 = vmatprep.subr.bf16.mxu0 %v1677
  %1731 = vmatpush1.bf16.msra.mxu0 %v1676
  %1732 = vmatprep.subr.bf16.mxu0 %v1679
  %1733 = vmatpush1.bf16.msra.mxu0 %v1678
  %1734 = vmatprep.subr.bf16.mxu0 %v1681
  %1735 = vmatpush1.bf16.msra.mxu0 %v1680
  %1736 = vmatprep.subr.bf16.mxu0 %v1683
  %1737 = vmatpush1.bf16.msra.mxu0 %v1682
  %1738 = vmatprep.subr.bf16.mxu0 %v1685
  %1739 = vmatpush1.bf16.msra.mxu0 %v1684
  %1740 = vmatprep.subr.bf16.mxu0 %v1687
  %1741 = vmatpush1.bf16.msra.mxu0 %v1686
  %1742 = vmatprep.subr.bf16.mxu0 %v1689
  %1743 = vmatpush1.bf16.msra.mxu0 %v1688
  %1744 = vmatprep.subr.bf16.mxu0 0
  %1745 = vmatpush1.bf16.msra.mxu0 0
  %1746 = vmatprep.subr.bf16.mxu0 0
  %1747 = vmatpush1.bf16.msra.mxu0 0
  %1748 = vmatprep.subr.bf16.mxu0 0
  %1749 = vmatpush1.bf16.msra.mxu0 0
  %1750 = vmatprep.subr.bf16.mxu0 0
  %1751 = vmatpush1.bf16.msra.mxu0 0
  %1752 = vmatprep.mubr.bf16.mxu0 %v1715
  %1753 = vmatmul.mubr.bf16.gmra.mrb[0].mxu0 %v1584
  %v1754 = vpop.f32.mrb[0].mxu0
  %v1755 = vadd.f32 0.0, %v1754
  %v1756 = vpop.f32.mrb[0].mxu0
  %v1757 = vadd.f32 0.0, %v1756
  %v1758 = vpop.f32.mrb[0].mxu0
  %v1759 = vadd.f32 0.0, %v1758
  %v1760 = vpop.f32.mrb[0].mxu0
  %v1761 = vadd.f32 0.0, %v1760
  %1762 = vmatprep.mubr.bf16.mxu0 %v1718
  %1763 = vmatmul.mubr.bf16.gmra.mrb[0].mxu0 %v1589
  %v1764 = vpop.f32.mrb[0].mxu0
  %v1765 = vadd.f32 0.0, %v1764
  %v1766 = vpop.f32.mrb[0].mxu0
  %v1767 = vadd.f32 0.0, %v1766
  %v1768 = vpop.f32.mrb[0].mxu0
  %v1769 = vadd.f32 0.0, %v1768
  %v1770 = vpop.f32.mrb[0].mxu0
  %v1771 = vadd.f32 0.0, %v1770
  %1772 = vdwg.mxu0
  %v1773 = vadd.f32 %v1537, %v1755
  %v1774 = vadd.f32 %v1538, %v1757
  %v1775 = vadd.f32 %v1539, %v1759
  %v1776 = vadd.f32 %v1540, %v1761
  %v1777 = vadd.f32 %v1541, %v1765
  %v1778 = vadd.f32 %v1542, %v1767
  %v1779 = vadd.f32 %v1543, %v1769
  %v1780 = vadd.f32 %v1544, %v1771
  %v1781 = vld [vmem:[#allocation2 + $0x20] sm:$0xff]
  %v1782 = vld [vmem:[#allocation2 + $0x28] sm:$0xff]
  %s1783 = scalar_lea.vmem %s3, 768
  %v1784 = vld [vmem:[%s1783] sm:$0xff]
  %v1785 = vld [vmem:[%s1783 + $0x8] sm:$0xff]
  %v1786 = vld [vmem:[%s1783 + $0x10] sm:$0xff]
  %v1787 = vld [vmem:[%s1783 + $0x18] sm:$0xff]
  %v1788 = vld [vmem:[%s1783 + $0x20] sm:$0xff]
  %v1789 = vld [vmem:[%s1783 + $0x28] sm:$0xff]
  %v1790 = vld [vmem:[%s1783 + $0x30] sm:$0xff]
  %v1791 = vld [vmem:[%s1783 + $0x38] sm:$0xff]
  %v1792 = vld [vmem:[%s1783 + $0x40] sm:$0xff]
  %v1793 = vld [vmem:[%s1783 + $0x48] sm:$0xff]
  %v1794 = vld [vmem:[%s1783 + $0x50] sm:$0xff]
  %v1795 = vld [vmem:[%s1783 + $0x58] sm:$0xff]
  %v1796 = vld [vmem:[%s1783 + $0x60] sm:$0xff]
  %v1797 = vld [vmem:[%s1783 + $0x68] sm:$0xff]
  %v1798 = vld [vmem:[%s1783 + $0x70] sm:$0xff]
  %v1799 = vld [vmem:[%s1783 + $0x78] sm:$0xff]
  %v1800 = vld [vmem:[%s1783 + $0x80] sm:$0xff]
  %v1801 = vld [vmem:[%s1783 + $0x88] sm:$0xff]
  %v1802 = vld [vmem:[%s1783 + $0x90] sm:$0xff]
  %v1803 = vld [vmem:[%s1783 + $0x98] sm:$0xff]
  %v1804 = vld [vmem:[%s1783 + $0xa0] sm:$0xff]
  %v1805 = vld [vmem:[%s1783 + $0xa8] sm:$0xff]
  %v1806 = vld [vmem:[%s1783 + $0xb0] sm:$0xff]
  %v1807 = vld [vmem:[%s1783 + $0xb8] sm:$0xff]
  %v1832 = vunpack.c.l.b16 %v1784
  %v1833 = vunpack.c.h.b16 %v1784
  %v1834 = vunpack.c.l.b16 %v1785
  %v1835 = vunpack.c.h.b16 %v1785
  %v1836 = vunpack.c.l.b16 %v1786
  %v1837 = vunpack.c.h.b16 %v1786
  %v1838 = vunpack.c.l.b16 %v1787
  %v1839 = vunpack.c.h.b16 %v1787
  %v1840 = vunpack.c.l.b16 %v1788
  %v1841 = vunpack.c.h.b16 %v1788
  %v1842 = vunpack.c.l.b16 %v1789
  %v1843 = vunpack.c.h.b16 %v1789
  %v1844 = vunpack.c.l.b16 %v1790
  %v1845 = vunpack.c.h.b16 %v1790
  %v1846 = vunpack.c.l.b16 %v1791
  %v1847 = vunpack.c.h.b16 %v1791
  %v1848 = vunpack.c.l.b16 %v1792
  %v1849 = vunpack.c.h.b16 %v1792
  %v1850 = vunpack.c.l.b16 %v1793
  %v1851 = vunpack.c.h.b16 %v1793
  %v1852 = vunpack.c.l.b16 %v1794
  %v1853 = vunpack.c.h.b16 %v1794
  %v1854 = vunpack.c.l.b16 %v1795
  %v1855 = vunpack.c.h.b16 %v1795
  %v1856 = vunpack.c.l.b16 %v1796
  %v1857 = vunpack.c.h.b16 %v1796
  %v1858 = vunpack.c.l.b16 %v1797
  %v1859 = vunpack.c.h.b16 %v1797
  %v1860 = vunpack.c.l.b16 %v1798
  %v1861 = vunpack.c.h.b16 %v1798
  %v1862 = vunpack.c.l.b16 %v1799
  %v1863 = vunpack.c.h.b16 %v1799
  %v1864 = vunpack.c.l.b16 %v1800
  %v1865 = vunpack.c.h.b16 %v1800
  %v1866 = vunpack.c.l.b16 %v1801
  %v1867 = vunpack.c.h.b16 %v1801
  %v1868 = vunpack.c.l.b16 %v1802
  %v1869 = vunpack.c.h.b16 %v1802
  %v1870 = vunpack.c.l.b16 %v1803
  %v1871 = vunpack.c.h.b16 %v1803
  %v1872 = vunpack.c.l.b16 %v1804
  %v1873 = vunpack.c.h.b16 %v1804
  %v1874 = vunpack.c.l.b16 %v1805
  %v1875 = vunpack.c.h.b16 %v1805
  %v1876 = vunpack.c.l.b16 %v1806
  %v1877 = vunpack.c.h.b16 %v1806
  %v1878 = vunpack.c.l.b16 %v1807
  %v1879 = vunpack.c.h.b16 %v1807
  %v1880 = vpack.c.b16 %v1834, %v1832
  %v1881 = vpack.c.b16 %v1835, %v1833
  %v1882 = vpack.c.b16 %v1838, %v1836
  %v1883 = vpack.c.b16 %v1839, %v1837
  %v1884 = vpack.c.b16 %v1842, %v1840
  %v1885 = vpack.c.b16 %v1843, %v1841
  %v1886 = vpack.c.b16 %v1846, %v1844
  %v1887 = vpack.c.b16 %v1847, %v1845
  %v1888 = vpack.c.b16 %v1850, %v1848
  %v1889 = vpack.c.b16 %v1851, %v1849
  %v1890 = vpack.c.b16 %v1854, %v1852
  %v1891 = vpack.c.b16 %v1855, %v1853
  %v1892 = vpack.c.b16 %v1858, %v1856
  %v1893 = vpack.c.b16 %v1859, %v1857
  %v1894 = vpack.c.b16 %v1862, %v1860
  %v1895 = vpack.c.b16 %v1863, %v1861
  %v1896 = vpack.c.b16 %v1866, %v1864
  %v1897 = vpack.c.b16 %v1867, %v1865
  %v1898 = vpack.c.b16 %v1870, %v1868
  %v1899 = vpack.c.b16 %v1871, %v1869
  %v1900 = vpack.c.b16 %v1874, %v1872
  %v1901 = vpack.c.b16 %v1875, %v1873
  %v1902 = vpack.c.b16 %v1878, %v1876
  %v1903 = vpack.c.b16 %v1879, %v1877
  %v1929 = vsel %vm838, %v1311, 0
  %v1932 = vsel %vm838, %v1782, 0
  %1934 = vmatprep.subr.bf16.mxu0 %v1881
  %1935 = vmatpush1.bf16.msra.mxu0 %v1880
  %1936 = vmatprep.subr.bf16.mxu0 %v1883
  %1937 = vmatpush1.bf16.msra.mxu0 %v1882
  %1938 = vmatprep.subr.bf16.mxu0 %v1885
  %1939 = vmatpush1.bf16.msra.mxu0 %v1884
  %1940 = vmatprep.subr.bf16.mxu0 %v1887
  %1941 = vmatpush1.bf16.msra.mxu0 %v1886
  %1942 = vmatprep.subr.bf16.mxu0 %v1889
  %1943 = vmatpush1.bf16.msra.mxu0 %v1888
  %1944 = vmatprep.subr.bf16.mxu0 %v1891
  %1945 = vmatpush1.bf16.msra.mxu0 %v1890
  %1946 = vmatprep.subr.bf16.mxu0 %v1893
  %1947 = vmatpush1.bf16.msra.mxu0 %v1892
  %1948 = vmatprep.subr.bf16.mxu0 %v1895
  %1949 = vmatpush1.bf16.msra.mxu0 %v1894
  %1950 = vmatprep.subr.bf16.mxu0 %v1897
  %1951 = vmatpush1.bf16.msra.mxu0 %v1896
  %1952 = vmatprep.subr.bf16.mxu0 %v1899
  %1953 = vmatpush1.bf16.msra.mxu0 %v1898
  %1954 = vmatprep.subr.bf16.mxu0 %v1901
  %1955 = vmatpush1.bf16.msra.mxu0 %v1900
  %1956 = vmatprep.subr.bf16.mxu0 %v1903
  %1957 = vmatpush1.bf16.msra.mxu0 %v1902
  %1958 = vmatprep.subr.bf16.mxu0 0
  %1959 = vmatpush1.bf16.msra.mxu0 0
  %1960 = vmatprep.subr.bf16.mxu0 0
  %1961 = vmatpush1.bf16.msra.mxu0 0
  %1962 = vmatprep.subr.bf16.mxu0 0
  %1963 = vmatpush1.bf16.msra.mxu0 0
  %1964 = vmatprep.subr.bf16.mxu0 0
  %1965 = vmatpush1.bf16.msra.mxu0 0
  %1966 = vmatprep.mubr.bf16.mxu0 %v1929
  %1967 = vmatmul.mubr.bf16.gmra.mrb[0].mxu0 %v1310
  %v1968 = vpop.f32.mrb[0].mxu0
  %v1969 = vadd.f32 0.0, %v1968
  %v1970 = vpop.f32.mrb[0].mxu0
  %v1971 = vadd.f32 0.0, %v1970
  %v1972 = vpop.f32.mrb[0].mxu0
  %v1973 = vadd.f32 0.0, %v1972
  %v1974 = vpop.f32.mrb[0].mxu0
  %v1975 = vadd.f32 0.0, %v1974
  %1976 = vmatprep.mubr.bf16.mxu0 %v1932
  %1977 = vmatmul.mubr.bf16.gmra.mrb[0].mxu0 %v1781
  %v1978 = vpop.f32.mrb[0].mxu0
  %v1979 = vadd.f32 0.0, %v1978
  %v1980 = vpop.f32.mrb[0].mxu0
  %v1981 = vadd.f32 0.0, %v1980
  %v1982 = vpop.f32.mrb[0].mxu0
  %v1983 = vadd.f32 0.0, %v1982
  %v1984 = vpop.f32.mrb[0].mxu0
  %v1985 = vadd.f32 0.0, %v1984
  %1986 = vdwg.mxu0
  %v1987 = vadd.f32 %v1773, %v1969
  %v1988 = vadd.f32 %v1774, %v1971
  %v1989 = vadd.f32 %v1775, %v1973
  %v1990 = vadd.f32 %v1776, %v1975
  %v1991 = vadd.f32 %v1777, %v1979
  %v1992 = vadd.f32 %v1778, %v1981
  %v1993 = vadd.f32 %v1779, %v1983
  %v1994 = vadd.f32 %v1780, %v1985
  %v1995 = vmax.f32 %v1987, %v1988
  %v1996 = vmax.f32 %v1989, %v1990
  %v1997 = vmax.f32 %v1991, %v1992
  %v1998 = vmax.f32 %v1993, %v1994
  %1999 = vmatprep.subr.bf16.mxu0 %v1023
  %2000 = vmatpush1.bf16.msra.mxu0 %v1022
  %2001 = vmatprep.subr.bf16.mxu0 %v1025
  %2002 = vmatpush1.bf16.msra.mxu0 %v1024
  %2003 = vmatprep.subr.bf16.mxu0 %v1027
  %2004 = vmatpush1.bf16.msra.mxu0 %v1026
  %2005 = vmatprep.subr.bf16.mxu0 %v1029
  %2006 = vmatpush1.bf16.msra.mxu0 %v1028
  %2007 = vmatprep.subr.bf16.mxu0 %v1031
  %2008 = vmatpush1.bf16.msra.mxu0 %v1030
  %2009 = vmatprep.subr.bf16.mxu0 %v1033
  %2010 = vmatpush1.bf16.msra.mxu0 %v1032
  %2011 = vmatprep.subr.bf16.mxu0 %v1035
  %2012 = vmatpush1.bf16.msra.mxu0 %v1034
  %2013 = vmatprep.subr.bf16.mxu0 %v1037
  %2014 = vmatpush1.bf16.msra.mxu0 %v1036
  %2015 = vmatprep.subr.bf16.mxu0 %v1039
  %2016 = vmatpush1.bf16.msra.mxu0 %v1038
  %2017 = vmatprep.subr.bf16.mxu0 %v1041
  %2018 = vmatpush1.bf16.msra.mxu0 %v1040
  %2019 = vmatprep.subr.bf16.mxu0 %v1043
  %2020 = vmatpush1.bf16.msra.mxu0 %v1042
  %2021 = vmatprep.subr.bf16.mxu0 %v1045
  %2022 = vmatpush1.bf16.msra.mxu0 %v1044
  %2023 = vmatprep.subr.bf16.mxu0 0
  %2024 = vmatpush1.bf16.msra.mxu0 0
  %2025 = vmatprep.subr.bf16.mxu0 0
  %2026 = vmatpush1.bf16.msra.mxu0 0
  %2027 = vmatprep.subr.bf16.mxu0 0
  %2028 = vmatpush1.bf16.msra.mxu0 0
  %2029 = vmatprep.subr.bf16.mxu0 0
  %2030 = vmatpush1.bf16.msra.mxu0 0
  %2031 = vmatprep.mubr.bf16.mxu0 %v1479
  %2032 = vmatmul.mubr.bf16.gmra.mrb[0].mxu0 %v1348
  %v2033 = vpop.f32.mrb[0].mxu0
  %v2034 = vadd.f32 0.0, %v2033
  %v2035 = vpop.f32.mrb[0].mxu0
  %v2036 = vadd.f32 0.0, %v2035
  %v2037 = vpop.f32.mrb[0].mxu0
  %v2038 = vadd.f32 0.0, %v2037
  %v2039 = vpop.f32.mrb[0].mxu0
  %v2040 = vadd.f32 0.0, %v2039
  %2041 = vmatprep.mubr.bf16.mxu0 %v1482
  %2042 = vmatmul.mubr.bf16.gmra.mrb[0].mxu0 %v1353
  %v2043 = vpop.f32.mrb[0].mxu0
  %v2044 = vadd.f32 0.0, %v2043
  %v2045 = vpop.f32.mrb[0].mxu0
  %v2046 = vadd.f32 0.0, %v2045
  %v2047 = vpop.f32.mrb[0].mxu0
  %v2048 = vadd.f32 0.0, %v2047
  %v2049 = vpop.f32.mrb[0].mxu0
  %v2050 = vadd.f32 0.0, %v2049
  %2051 = vdwg.mxu0
  %2052 = vmatprep.subr.bf16.mxu0 %v1202
  %2053 = vmatpush1.bf16.msra.mxu0 %v1201
  %2054 = vmatprep.subr.bf16.mxu0 %v1204
  %2055 = vmatpush1.bf16.msra.mxu0 %v1203
  %2056 = vmatprep.subr.bf16.mxu0 %v1206
  %2057 = vmatpush1.bf16.msra.mxu0 %v1205
  %2058 = vmatprep.subr.bf16.mxu0 %v1208
  %2059 = vmatpush1.bf16.msra.mxu0 %v1207
  %2060 = vmatprep.subr.bf16.mxu0 %v1210
  %2061 = vmatpush1.bf16.msra.mxu0 %v1209
  %2062 = vmatprep.subr.bf16.mxu0 %v1212
  %2063 = vmatpush1.bf16.msra.mxu0 %v1211
  %2064 = vmatprep.subr.bf16.mxu0 %v1214
  %2065 = vmatpush1.bf16.msra.mxu0 %v1213
  %2066 = vmatprep.subr.bf16.mxu0 %v1216
  %2067 = vmatpush1.bf16.msra.mxu0 %v1215
  %2068 = vmatprep.subr.bf16.mxu0 %v1218
  %2069 = vmatpush1.bf16.msra.mxu0 %v1217
  %2070 = vmatprep.subr.bf16.mxu0 %v1220
  %2071 = vmatpush1.bf16.msra.mxu0 %v1219
  %2072 = vmatprep.subr.bf16.mxu0 %v1222
  %2073 = vmatpush1.bf16.msra.mxu0 %v1221
  %2074 = vmatprep.subr.bf16.mxu0 %v1224
  %2075 = vmatpush1.bf16.msra.mxu0 %v1223
  %2076 = vmatprep.subr.bf16.mxu0 0
  %2077 = vmatpush1.bf16.msra.mxu0 0
  %2078 = vmatprep.subr.bf16.mxu0 0
  %2079 = vmatpush1.bf16.msra.mxu0 0
  %2080 = vmatprep.subr.bf16.mxu0 0
  %2081 = vmatpush1.bf16.msra.mxu0 0
  %2082 = vmatprep.subr.bf16.mxu0 0
  %2083 = vmatpush1.bf16.msra.mxu0 0
  %2084 = vmatprep.mubr.bf16.mxu0 %v1071
  %2085 = vmatmul.mubr.bf16.gmra.mrb[0].mxu0 %v921
  %v2086 = vpop.f32.mrb[0].mxu0
  %v2087 = vadd.f32 %v2034, %v2086
  %v2088 = vpop.f32.mrb[0].mxu0
  %v2089 = vadd.f32 %v2036, %v2088
  %v2090 = vpop.f32.mrb[0].mxu0
  %v2091 = vadd.f32 %v2038, %v2090
  %v2092 = vpop.f32.mrb[0].mxu0
  %v2093 = vadd.f32 %v2040, %v2092
  %2094 = vmatprep.mubr.bf16.mxu0 %v1074
  %2095 = vmatmul.mubr.bf16.gmra.mrb[0].mxu0 %v923
  %v2096 = vpop.f32.mrb[0].mxu0
  %v2097 = vadd.f32 %v2044, %v2096
  %v2098 = vpop.f32.mrb[0].mxu0
  %v2099 = vadd.f32 %v2046, %v2098
  %v2100 = vpop.f32.mrb[0].mxu0
  %v2101 = vadd.f32 %v2048, %v2100
  %v2102 = vpop.f32.mrb[0].mxu0
  %v2103 = vadd.f32 %v2050, %v2102
  %2104 = vdwg.mxu0
  %2105 = vmatprep.subr.bf16.mxu0 %v1431
  %2106 = vmatpush1.bf16.msra.mxu0 %v1430
  %2107 = vmatprep.subr.bf16.mxu0 %v1433
  %2108 = vmatpush1.bf16.msra.mxu0 %v1432
  %2109 = vmatprep.subr.bf16.mxu0 %v1435
  %2110 = vmatpush1.bf16.msra.mxu0 %v1434
  %2111 = vmatprep.subr.bf16.mxu0 %v1437
  %2112 = vmatpush1.bf16.msra.mxu0 %v1436
  %2113 = vmatprep.subr.bf16.mxu0 %v1439
  %2114 = vmatpush1.bf16.msra.mxu0 %v1438
  %2115 = vmatprep.subr.bf16.mxu0 %v1441
  %2116 = vmatpush1.bf16.msra.mxu0 %v1440
  %2117 = vmatprep.subr.bf16.mxu0 %v1443
  %2118 = vmatpush1.bf16.msra.mxu0 %v1442
  %2119 = vmatprep.subr.bf16.mxu0 %v1445
  %2120 = vmatpush1.bf16.msra.mxu0 %v1444
  %2121 = vmatprep.subr.bf16.mxu0 %v1447
  %2122 = vmatpush1.bf16.msra.mxu0 %v1446
  %2123 = vmatprep.subr.bf16.mxu0 %v1449
  %2124 = vmatpush1.bf16.msra.mxu0 %v1448
  %2125 = vmatprep.subr.bf16.mxu0 %v1451
  %2126 = vmatpush1.bf16.msra.mxu0 %v1450
  %2127 = vmatprep.subr.bf16.mxu0 %v1453
  %2128 = vmatpush1.bf16.msra.mxu0 %v1452
  %2129 = vmatprep.subr.bf16.mxu0 0
  %2130 = vmatpush1.bf16.msra.mxu0 0
  %2131 = vmatprep.subr.bf16.mxu0 0
  %2132 = vmatpush1.bf16.msra.mxu0 0
  %2133 = vmatprep.subr.bf16.mxu0 0
  %2134 = vmatpush1.bf16.msra.mxu0 0
  %2135 = vmatprep.subr.bf16.mxu0 0
  %2136 = vmatpush1.bf16.msra.mxu0 0
  %2137 = vmatprep.mubr.bf16.mxu0 %v1715
  %2138 = vmatmul.mubr.bf16.gmra.mrb[0].mxu0 %v1584
  %v2139 = vpop.f32.mrb[0].mxu0
  %v2140 = vadd.f32 0.0, %v2139
  %v2141 = vpop.f32.mrb[0].mxu0
  %v2142 = vadd.f32 0.0, %v2141
  %v2143 = vpop.f32.mrb[0].mxu0
  %v2144 = vadd.f32 0.0, %v2143
  %v2145 = vpop.f32.mrb[0].mxu0
  %v2146 = vadd.f32 0.0, %v2145
  %2147 = vmatprep.mubr.bf16.mxu0 %v1718
  %2148 = vmatmul.mubr.bf16.gmra.mrb[0].mxu0 %v1589
  %v2149 = vpop.f32.mrb[0].mxu0
  %v2150 = vadd.f32 0.0, %v2149
  %v2151 = vpop.f32.mrb[0].mxu0
  %v2152 = vadd.f32 0.0, %v2151
  %v2153 = vpop.f32.mrb[0].mxu0
  %v2154 = vadd.f32 0.0, %v2153
  %v2155 = vpop.f32.mrb[0].mxu0
  %v2156 = vadd.f32 0.0, %v2155
  %2157 = vdwg.mxu0
  %v2158 = vadd.f32 %v2087, %v2140
  %v2159 = vadd.f32 %v2089, %v2142
  %v2160 = vadd.f32 %v2091, %v2144
  %v2161 = vadd.f32 %v2093, %v2146
  %v2162 = vadd.f32 %v2097, %v2150
  %v2163 = vadd.f32 %v2099, %v2152
  %v2164 = vadd.f32 %v2101, %v2154
  %v2165 = vadd.f32 %v2103, %v2156
  %2166 = vmatprep.subr.bf16.mxu0 %v1667
  %2167 = vmatpush1.bf16.msra.mxu0 %v1666
  %2168 = vmatprep.subr.bf16.mxu0 %v1669
  %2169 = vmatpush1.bf16.msra.mxu0 %v1668
  %2170 = vmatprep.subr.bf16.mxu0 %v1671
  %2171 = vmatpush1.bf16.msra.mxu0 %v1670
  %2172 = vmatprep.subr.bf16.mxu0 %v1673
  %2173 = vmatpush1.bf16.msra.mxu0 %v1672
  %2174 = vmatprep.subr.bf16.mxu0 %v1675
  %2175 = vmatpush1.bf16.msra.mxu0 %v1674
  %2176 = vmatprep.subr.bf16.mxu0 %v1677
  %2177 = vmatpush1.bf16.msra.mxu0 %v1676
  %2178 = vmatprep.subr.bf16.mxu0 %v1679
  %2179 = vmatpush1.bf16.msra.mxu0 %v1678
  %2180 = vmatprep.subr.bf16.mxu0 %v1681
  %2181 = vmatpush1.bf16.msra.mxu0 %v1680
  %2182 = vmatprep.subr.bf16.mxu0 %v1683
  %2183 = vmatpush1.bf16.msra.mxu0 %v1682
  %2184 = vmatprep.subr.bf16.mxu0 %v1685
  %2185 = vmatpush1.bf16.msra.mxu0 %v1684
  %2186 = vmatprep.subr.bf16.mxu0 %v1687
  %2187 = vmatpush1.bf16.msra.mxu0 %v1686
  %2188 = vmatprep.subr.bf16.mxu0 %v1689
  %2189 = vmatpush1.bf16.msra.mxu0 %v1688
  %2190 = vmatprep.subr.bf16.mxu0 0
  %2191 = vmatpush1.bf16.msra.mxu0 0
  %2192 = vmatprep.subr.bf16.mxu0 0
  %2193 = vmatpush1.bf16.msra.mxu0 0
  %2194 = vmatprep.subr.bf16.mxu0 0
  %2195 = vmatpush1.bf16.msra.mxu0 0
  %2196 = vmatprep.subr.bf16.mxu0 0
  %2197 = vmatpush1.bf16.msra.mxu0 0
  %2198 = vmatprep.mubr.bf16.mxu0 %v1929
  %2199 = vmatmul.mubr.bf16.gmra.mrb[0].mxu0 %v1310
  %v2200 = vpop.f32.mrb[0].mxu0
  %v2201 = vadd.f32 0.0, %v2200
  %v2202 = vpop.f32.mrb[0].mxu0
  %v2203 = vadd.f32 0.0, %v2202
  %v2204 = vpop.f32.mrb[0].mxu0
  %v2205 = vadd.f32 0.0, %v2204
  %v2206 = vpop.f32.mrb[0].mxu0
  %v2207 = vadd.f32 0.0, %v2206
  %2208 = vmatprep.mubr.bf16.mxu0 %v1932
  %2209 = vmatmul.mubr.bf16.gmra.mrb[0].mxu0 %v1781
  %v2210 = vpop.f32.mrb[0].mxu0
  %v2211 = vadd.f32 0.0, %v2210
  %v2212 = vpop.f32.mrb[0].mxu0
  %v2213 = vadd.f32 0.0, %v2212
  %v2214 = vpop.f32.mrb[0].mxu0
  %v2215 = vadd.f32 0.0, %v2214
  %v2216 = vpop.f32.mrb[0].mxu0
  %v2217 = vadd.f32 0.0, %v2216
  %2218 = vdwg.mxu0
  %v2219 = vadd.f32 %v2158, %v2201
  %v2220 = vadd.f32 %v2159, %v2203
  %v2221 = vadd.f32 %v2160, %v2205
  %v2222 = vadd.f32 %v2161, %v2207
  %v2223 = vadd.f32 %v2162, %v2211
  %v2224 = vadd.f32 %v2163, %v2213
  %v2225 = vadd.f32 %v2164, %v2215
  %v2226 = vadd.f32 %v2165, %v2217
  %v2227 = vld [vmem:[%s886 + $0x20] sm:$0xff]
  %v2228 = vld [vmem:[%s886 + $0x28] sm:$0xff]
  %v2230 = vsel %vm838, %v1548, 0
  %v2233 = vsel %vm838, %v2228, 0
  %2235 = vmatprep.subr.bf16.mxu0 %v1881
  %2236 = vmatpush1.bf16.msra.mxu0 %v1880
  %2237 = vmatprep.subr.bf16.mxu0 %v1883
  %2238 = vmatpush1.bf16.msra.mxu0 %v1882
  %2239 = vmatprep.subr.bf16.mxu0 %v1885
  %2240 = vmatpush1.bf16.msra.mxu0 %v1884
  %2241 = vmatprep.subr.bf16.mxu0 %v1887
  %2242 = vmatpush1.bf16.msra.mxu0 %v1886
  %2243 = vmatprep.subr.bf16.mxu0 %v1889
  %2244 = vmatpush1.bf16.msra.mxu0 %v1888
  %2245 = vmatprep.subr.bf16.mxu0 %v1891
  %2246 = vmatpush1.bf16.msra.mxu0 %v1890
  %2247 = vmatprep.subr.bf16.mxu0 %v1893
  %2248 = vmatpush1.bf16.msra.mxu0 %v1892
  %2249 = vmatprep.subr.bf16.mxu0 %v1895
  %2250 = vmatpush1.bf16.msra.mxu0 %v1894
  %2251 = vmatprep.subr.bf16.mxu0 %v1897
  %2252 = vmatpush1.bf16.msra.mxu0 %v1896
  %2253 = vmatprep.subr.bf16.mxu0 %v1899
  %2254 = vmatpush1.bf16.msra.mxu0 %v1898
  %2255 = vmatprep.subr.bf16.mxu0 %v1901
  %2256 = vmatpush1.bf16.msra.mxu0 %v1900
  %2257 = vmatprep.subr.bf16.mxu0 %v1903
  %2258 = vmatpush1.bf16.msra.mxu0 %v1902
  %2259 = vmatprep.subr.bf16.mxu0 0
  %2260 = vmatpush1.bf16.msra.mxu0 0
  %2261 = vmatprep.subr.bf16.mxu0 0
  %2262 = vmatpush1.bf16.msra.mxu0 0
  %2263 = vmatprep.subr.bf16.mxu0 0
  %2264 = vmatpush1.bf16.msra.mxu0 0
  %2265 = vmatprep.subr.bf16.mxu0 0
  %2266 = vmatpush1.bf16.msra.mxu0 0
  %2267 = vmatprep.mubr.bf16.mxu0 %v2230
  %2268 = vmatmul.mubr.bf16.gmra.mrb[0].mxu0 %v1547
  %v2269 = vpop.f32.mrb[0].mxu0
  %v2270 = vadd.f32 0.0, %v2269
  %v2271 = vpop.f32.mrb[0].mxu0
  %v2272 = vadd.f32 0.0, %v2271
  %v2273 = vpop.f32.mrb[0].mxu0
  %v2274 = vadd.f32 0.0, %v2273
  %v2275 = vpop.f32.mrb[0].mxu0
  %v2276 = vadd.f32 0.0, %v2275
  %2277 = vmatprep.mubr.bf16.mxu0 %v2233
  %2278 = vmatmul.mubr.bf16.gmra.mrb[0].mxu0 %v2227
  %v2279 = vpop.f32.mrb[0].mxu0
  %v2280 = vadd.f32 0.0, %v2279
  %v2281 = vpop.f32.mrb[0].mxu0
  %v2282 = vadd.f32 0.0, %v2281
  %v2283 = vpop.f32.mrb[0].mxu0
  %v2284 = vadd.f32 0.0, %v2283
  %v2285 = vpop.f32.mrb[0].mxu0
  %v2286 = vadd.f32 0.0, %v2285
  %2287 = vdwg.mxu0
  %v2288 = vadd.f32 %v2219, %v2270
  %v2289 = vadd.f32 %v2220, %v2272
  %v2290 = vadd.f32 %v2221, %v2274
  %v2291 = vadd.f32 %v2222, %v2276
  %v2292 = vadd.f32 %v2223, %v2280
  %v2293 = vadd.f32 %v2224, %v2282
  %v2294 = vadd.f32 %v2225, %v2284
  %v2295 = vadd.f32 %v2226, %v2286
  %v2296 = vmax.f32 %v2288, %v2289
  %v2297 = vmax.f32 %v2290, %v2291
  %v2298 = vmax.f32 %v2292, %v2293
  %v2299 = vmax.f32 %v2294, %v2295
  %v2300 = vmax.f32 %v1995, %v2296
  %v2301 = vmax.f32 %v1996, %v2297
  %v2302 = vmax.f32 %v1997, %v2298
  %v2303 = vmax.f32 %v1998, %v2299
  %v2305 = vlaneseq
  %v2306 = vshrl.u32 %v2305, 7
  %v2307 = vsub.s32 0, %v2306
  %v2308 = vrot.slane %v58, %v2307
  %v2310 = vadd.f32 %v2300, %v2308
  %v2311 = vadd.f32 %v2301, %v2308
  %v2312 = vadd.f32 %v2302, %v2308
  %v2313 = vadd.f32 %v2303, %v2308
  %v2314 = vmax.f32 %v2310, 0.0
  %v2315 = vmax.f32 %v2311, 0.0
  %v2316 = vmax.f32 %v2312, 0.0
  %v2317 = vmax.f32 %v2313, 0.0
  %v2318 = vpack.c.bf16 %v2315, %v2314
  %v2319 = vpack.c.bf16 %v2317, %v2316
  %v2320 = vld [vmem:[%s5] sm:$0xf]
  %v2321 = vld [vmem:[%s5 + $0x4] sm:$0xf]
  %v2322 = vld [vmem:[%s5 + $0x8] sm:$0xf]
  %v2323 = vld [vmem:[%s5 + $0xc] sm:$0xf]
  %v2324 = vld [vmem:[%s5 + $0x10] sm:$0xf]
  %v2325 = vld [vmem:[%s5 + $0x14] sm:$0xf]
  %v2326 = vld [vmem:[%s5 + $0x18] sm:$0xf]
  %v2327 = vld [vmem:[%s5 + $0x1c] sm:$0xf]
  %v2328 = vld [vmem:[%s5 + $0x20] sm:$0xf]
  %v2329 = vld [vmem:[%s5 + $0x24] sm:$0xf]
  %v2330 = vld [vmem:[%s5 + $0x28] sm:$0xf]
  %v2331 = vld [vmem:[%s5 + $0x2c] sm:$0xf]
  %v2332 = vld [vmem:[%s5 + $0x30] sm:$0xf]
  %v2333 = vld [vmem:[%s5 + $0x34] sm:$0xf]
  %v2334 = vld [vmem:[%s5 + $0x38] sm:$0xf]
  %v2335 = vld [vmem:[%s5 + $0x3c] sm:$0xf]
  %s2336 = scalar_lea.vmem %s5, 64
  %v2337 = vld [vmem:[%s2336] sm:$0xf]
  %v2338 = vld [vmem:[%s2336 + $0x4] sm:$0xf]
  %v2339 = vld [vmem:[%s2336 + $0x8] sm:$0xf]
  %v2340 = vld [vmem:[%s2336 + $0xc] sm:$0xf]
  %v2341 = vld [vmem:[%s2336 + $0x10] sm:$0xf]
  %v2342 = vld [vmem:[%s2336 + $0x14] sm:$0xf]
  %v2343 = vld [vmem:[%s2336 + $0x18] sm:$0xf]
  %v2344 = vld [vmem:[%s2336 + $0x1c] sm:$0xf]
  %v2345 = vld [vmem:[%s2336 + $0x20] sm:$0xf]
  %v2346 = vld [vmem:[%s2336 + $0x24] sm:$0xf]
  %v2347 = vld [vmem:[%s2336 + $0x28] sm:$0xf]
  %v2348 = vld [vmem:[%s2336 + $0x2c] sm:$0xf]
  %v2349 = vld [vmem:[%s2336 + $0x30] sm:$0xf]
  %v2350 = vld [vmem:[%s2336 + $0x34] sm:$0xf]
  %v2351 = vld [vmem:[%s2336 + $0x38] sm:$0xf]
  %v2352 = vld [vmem:[%s2336 + $0x3c] sm:$0xf]
  %v2354 = vrot.slane %v2318, 4
  %v2372 = vunpack.c.l.b16 %v2337
  %v2373 = vunpack.c.l.b16 %v2338
  %v2374 = vunpack.c.l.b16 %v2339
  %v2375 = vunpack.c.l.b16 %v2340
  %v2376 = vunpack.c.l.b16 %v2341
  %v2377 = vunpack.c.l.b16 %v2342
  %v2378 = vunpack.c.l.b16 %v2343
  %v2379 = vunpack.c.l.b16 %v2344
  %v2380 = vunpack.c.l.b16 %v2345
  %v2381 = vunpack.c.l.b16 %v2346
  %v2382 = vunpack.c.l.b16 %v2347
  %v2383 = vunpack.c.l.b16 %v2348
  %v2384 = vunpack.c.l.b16 %v2349
  %v2385 = vunpack.c.l.b16 %v2350
  %v2386 = vunpack.c.l.b16 %v2351
  %v2387 = vunpack.c.l.b16 %v2352
  %v2388 = vpack.c.b16 %v2373, %v2372
  %v2389 = vpack.c.b16 %v2375, %v2374
  %v2390 = vpack.c.b16 %v2377, %v2376
  %v2391 = vpack.c.b16 %v2379, %v2378
  %v2392 = vpack.c.b16 %v2381, %v2380
  %v2393 = vpack.c.b16 %v2383, %v2382
  %v2394 = vpack.c.b16 %v2385, %v2384
  %v2395 = vpack.c.b16 %v2387, %v2386
  %2404 = vmatprep.subr.bf16.mxu0 0
  %2405 = vmatpush1.bf16.msra.mxu0 %v2388
  %2406 = vmatprep.subr.bf16.mxu0 0
  %2407 = vmatpush1.bf16.msra.mxu0 %v2389
  %2408 = vmatprep.subr.bf16.mxu0 0
  %2409 = vmatpush1.bf16.msra.mxu0 %v2390
  %2410 = vmatprep.subr.bf16.mxu0 0
  %2411 = vmatpush1.bf16.msra.mxu0 %v2391
  %2412 = vmatprep.subr.bf16.mxu0 0
  %2413 = vmatpush1.bf16.msra.mxu0 %v2392
  %2414 = vmatprep.subr.bf16.mxu0 0
  %2415 = vmatpush1.bf16.msra.mxu0 %v2393
  %2416 = vmatprep.subr.bf16.mxu0 0
  %2417 = vmatpush1.bf16.msra.mxu0 %v2394
  %2418 = vmatprep.subr.bf16.mxu0 0
  %2419 = vmatpush1.bf16.msra.mxu0 %v2395
  %2420 = vmatprep.subr.bf16.mxu0 0
  %2421 = vmatpush1.bf16.msra.mxu0 0
  %2422 = vmatprep.subr.bf16.mxu0 0
  %2423 = vmatpush1.bf16.msra.mxu0 0
  %2424 = vmatprep.subr.bf16.mxu0 0
  %2425 = vmatpush1.bf16.msra.mxu0 0
  %2426 = vmatprep.subr.bf16.mxu0 0
  %2427 = vmatpush1.bf16.msra.mxu0 0
  %2428 = vmatprep.subr.bf16.mxu0 0
  %2429 = vmatpush1.bf16.msra.mxu0 0
  %2430 = vmatprep.subr.bf16.mxu0 0
  %2431 = vmatpush1.bf16.msra.mxu0 0
  %2432 = vmatprep.subr.bf16.mxu0 0
  %2433 = vmatpush1.bf16.msra.mxu0 0
  %2434 = vmatprep.subr.bf16.mxu0 0
  %2435 = vmatpush1.bf16.msra.mxu0 0
  %2436 = vmatprep.mubr.bf16.mxu0 0
  %2437 = vmatmul.mubr.bf16.gmra.mrb[0].mxu0 %v2354
  %v2438 = vpop.f32.mrb[0].mxu0
  %v2439 = vadd.f32 0.0, %v2438
  %v2440 = vpop.f32.mrb[0].mxu0
  %v2441 = vpop.f32.mrb[0].mxu0
  %v2442 = vpop.f32.mrb[0].mxu0
  %2443 = vdwg.mxu0
  %v2460 = vunpack.c.l.b16 %v2320
  %v2461 = vunpack.c.l.b16 %v2321
  %v2462 = vunpack.c.l.b16 %v2322
  %v2463 = vunpack.c.l.b16 %v2323
  %v2464 = vunpack.c.l.b16 %v2324
  %v2465 = vunpack.c.l.b16 %v2325
  %v2466 = vunpack.c.l.b16 %v2326
  %v2467 = vunpack.c.l.b16 %v2327
  %v2468 = vunpack.c.l.b16 %v2328
  %v2469 = vunpack.c.l.b16 %v2329
  %v2470 = vunpack.c.l.b16 %v2330
  %v2471 = vunpack.c.l.b16 %v2331
  %v2472 = vunpack.c.l.b16 %v2332
  %v2473 = vunpack.c.l.b16 %v2333
  %v2474 = vunpack.c.l.b16 %v2334
  %v2475 = vunpack.c.l.b16 %v2335
  %v2476 = vpack.c.b16 %v2461, %v2460
  %v2477 = vpack.c.b16 %v2463, %v2462
  %v2478 = vpack.c.b16 %v2465, %v2464
  %v2479 = vpack.c.b16 %v2467, %v2466
  %v2480 = vpack.c.b16 %v2469, %v2468
  %v2481 = vpack.c.b16 %v2471, %v2470
  %v2482 = vpack.c.b16 %v2473, %v2472
  %v2483 = vpack.c.b16 %v2475, %v2474
  %2492 = vmatprep.subr.bf16.mxu0 0
  %2493 = vmatpush1.bf16.msra.mxu0 %v2476
  %2494 = vmatprep.subr.bf16.mxu0 0
  %2495 = vmatpush1.bf16.msra.mxu0 %v2477
  %2496 = vmatprep.subr.bf16.mxu0 0
  %2497 = vmatpush1.bf16.msra.mxu0 %v2478
  %2498 = vmatprep.subr.bf16.mxu0 0
  %2499 = vmatpush1.bf16.msra.mxu0 %v2479
  %2500 = vmatprep.subr.bf16.mxu0 0
  %2501 = vmatpush1.bf16.msra.mxu0 %v2480
  %2502 = vmatprep.subr.bf16.mxu0 0
  %2503 = vmatpush1.bf16.msra.mxu0 %v2481
  %2504 = vmatprep.subr.bf16.mxu0 0
  %2505 = vmatpush1.bf16.msra.mxu0 %v2482
  %2506 = vmatprep.subr.bf16.mxu0 0
  %2507 = vmatpush1.bf16.msra.mxu0 %v2483
  %2508 = vmatprep.subr.bf16.mxu0 0
  %2509 = vmatpush1.bf16.msra.mxu0 0
  %2510 = vmatprep.subr.bf16.mxu0 0
  %2511 = vmatpush1.bf16.msra.mxu0 0
  %2512 = vmatprep.subr.bf16.mxu0 0
  %2513 = vmatpush1.bf16.msra.mxu0 0
  %2514 = vmatprep.subr.bf16.mxu0 0
  %2515 = vmatpush1.bf16.msra.mxu0 0
  %2516 = vmatprep.subr.bf16.mxu0 0
  %2517 = vmatpush1.bf16.msra.mxu0 0
  %2518 = vmatprep.subr.bf16.mxu0 0
  %2519 = vmatpush1.bf16.msra.mxu0 0
  %2520 = vmatprep.subr.bf16.mxu0 0
  %2521 = vmatpush1.bf16.msra.mxu0 0
  %2522 = vmatprep.subr.bf16.mxu0 0
  %2523 = vmatpush1.bf16.msra.mxu0 0
  %2524 = vmatprep.mubr.bf16.mxu0 0
  %2525 = vmatmul.mubr.bf16.gmra.mrb[0].mxu0 %v2318
  %v2526 = vpop.f32.mrb[0].mxu0
  %v2527 = vadd.f32 %v2439, %v2526
  %v2528 = vpop.f32.mrb[0].mxu0
  %v2529 = vpop.f32.mrb[0].mxu0
  %v2530 = vpop.f32.mrb[0].mxu0
  %2531 = vdwg.mxu0
  %s2532 = scalar_lea.vmem %s5, 128
  %v2533 = vld [vmem:[%s2532] sm:$0xf]
  %v2534 = vld [vmem:[%s2532 + $0x4] sm:$0xf]
  %v2535 = vld [vmem:[%s2532 + $0x8] sm:$0xf]
  %v2536 = vld [vmem:[%s2532 + $0xc] sm:$0xf]
  %v2537 = vld [vmem:[%s2532 + $0x10] sm:$0xf]
  %v2538 = vld [vmem:[%s2532 + $0x14] sm:$0xf]
  %v2539 = vld [vmem:[%s2532 + $0x18] sm:$0xf]
  %v2540 = vld [vmem:[%s2532 + $0x1c] sm:$0xf]
  %v2541 = vld [vmem:[%s2532 + $0x20] sm:$0xf]
  %v2542 = vld [vmem:[%s2532 + $0x24] sm:$0xf]
  %v2543 = vld [vmem:[%s2532 + $0x28] sm:$0xf]
  %v2544 = vld [vmem:[%s2532 + $0x2c] sm:$0xf]
  %v2545 = vld [vmem:[%s2532 + $0x30] sm:$0xf]
  %v2546 = vld [vmem:[%s2532 + $0x34] sm:$0xf]
  %v2547 = vld [vmem:[%s2532 + $0x38] sm:$0xf]
  %v2548 = vld [vmem:[%s2532 + $0x3c] sm:$0xf]
  %v2565 = vunpack.c.l.b16 %v2533
  %v2566 = vunpack.c.l.b16 %v2534
  %v2567 = vunpack.c.l.b16 %v2535
  %v2568 = vunpack.c.l.b16 %v2536
  %v2569 = vunpack.c.l.b16 %v2537
  %v2570 = vunpack.c.l.b16 %v2538
  %v2571 = vunpack.c.l.b16 %v2539
  %v2572 = vunpack.c.l.b16 %v2540
  %v2573 = vunpack.c.l.b16 %v2541
  %v2574 = vunpack.c.l.b16 %v2542
  %v2575 = vunpack.c.l.b16 %v2543
  %v2576 = vunpack.c.l.b16 %v2544
  %v2577 = vunpack.c.l.b16 %v2545
  %v2578 = vunpack.c.l.b16 %v2546
  %v2579 = vunpack.c.l.b16 %v2547
  %v2580 = vunpack.c.l.b16 %v2548
  %v2581 = vpack.c.b16 %v2566, %v2565
  %v2582 = vpack.c.b16 %v2568, %v2567
  %v2583 = vpack.c.b16 %v2570, %v2569
  %v2584 = vpack.c.b16 %v2572, %v2571
  %v2585 = vpack.c.b16 %v2574, %v2573
  %v2586 = vpack.c.b16 %v2576, %v2575
  %v2587 = vpack.c.b16 %v2578, %v2577
  %v2588 = vpack.c.b16 %v2580, %v2579
  %2597 = vmatprep.subr.bf16.mxu0 0
  %2598 = vmatpush1.bf16.msra.mxu0 %v2581
  %2599 = vmatprep.subr.bf16.mxu0 0
  %2600 = vmatpush1.bf16.msra.mxu0 %v2582
  %2601 = vmatprep.subr.bf16.mxu0 0
  %2602 = vmatpush1.bf16.msra.mxu0 %v2583
  %2603 = vmatprep.subr.bf16.mxu0 0
  %2604 = vmatpush1.bf16.msra.mxu0 %v2584
  %2605 = vmatprep.subr.bf16.mxu0 0
  %2606 = vmatpush1.bf16.msra.mxu0 %v2585
  %2607 = vmatprep.subr.bf16.mxu0 0
  %2608 = vmatpush1.bf16.msra.mxu0 %v2586
  %2609 = vmatprep.subr.bf16.mxu0 0
  %2610 = vmatpush1.bf16.msra.mxu0 %v2587
  %2611 = vmatprep.subr.bf16.mxu0 0
  %2612 = vmatpush1.bf16.msra.mxu0 %v2588
  %2613 = vmatprep.subr.bf16.mxu0 0
  %2614 = vmatpush1.bf16.msra.mxu0 0
  %2615 = vmatprep.subr.bf16.mxu0 0
  %2616 = vmatpush1.bf16.msra.mxu0 0
  %2617 = vmatprep.subr.bf16.mxu0 0
  %2618 = vmatpush1.bf16.msra.mxu0 0
  %2619 = vmatprep.subr.bf16.mxu0 0
  %2620 = vmatpush1.bf16.msra.mxu0 0
  %2621 = vmatprep.subr.bf16.mxu0 0
  %2622 = vmatpush1.bf16.msra.mxu0 0
  %2623 = vmatprep.subr.bf16.mxu0 0
  %2624 = vmatpush1.bf16.msra.mxu0 0
  %2625 = vmatprep.subr.bf16.mxu0 0
  %2626 = vmatpush1.bf16.msra.mxu0 0
  %2627 = vmatprep.subr.bf16.mxu0 0
  %2628 = vmatpush1.bf16.msra.mxu0 0
  %2629 = vmatprep.mubr.bf16.mxu0 0
  %2630 = vmatmul.mubr.bf16.gmra.mrb[0].mxu0 %v2319
  %v2631 = vpop.f32.mrb[0].mxu0
  %v2632 = vadd.f32 0.0, %v2631
  %v2633 = vpop.f32.mrb[0].mxu0
  %v2634 = vpop.f32.mrb[0].mxu0
  %v2635 = vpop.f32.mrb[0].mxu0
  %2636 = vdwg.mxu0
  %v2637 = vadd.f32 %v2527, %v2632
  %s2638 = scalar_lea.vmem %s5, 192
  %v2639 = vld [vmem:[%s2638] sm:$0xf]
  %v2640 = vld [vmem:[%s2638 + $0x4] sm:$0xf]
  %v2641 = vld [vmem:[%s2638 + $0x8] sm:$0xf]
  %v2642 = vld [vmem:[%s2638 + $0xc] sm:$0xf]
  %v2643 = vld [vmem:[%s2638 + $0x10] sm:$0xf]
  %v2644 = vld [vmem:[%s2638 + $0x14] sm:$0xf]
  %v2645 = vld [vmem:[%s2638 + $0x18] sm:$0xf]
  %v2646 = vld [vmem:[%s2638 + $0x1c] sm:$0xf]
  %v2647 = vld [vmem:[%s2638 + $0x20] sm:$0xf]
  %v2648 = vld [vmem:[%s2638 + $0x24] sm:$0xf]
  %v2649 = vld [vmem:[%s2638 + $0x28] sm:$0xf]
  %v2650 = vld [vmem:[%s2638 + $0x2c] sm:$0xf]
  %v2651 = vld [vmem:[%s2638 + $0x30] sm:$0xf]
  %v2652 = vld [vmem:[%s2638 + $0x34] sm:$0xf]
  %v2653 = vld [vmem:[%s2638 + $0x38] sm:$0xf]
  %v2654 = vld [vmem:[%s2638 + $0x3c] sm:$0xf]
  %v2656 = vrot.slane %v2319, 4
  %v2674 = vunpack.c.l.b16 %v2639
  %v2675 = vunpack.c.l.b16 %v2640
  %v2676 = vunpack.c.l.b16 %v2641
  %v2677 = vunpack.c.l.b16 %v2642
  %v2678 = vunpack.c.l.b16 %v2643
  %v2679 = vunpack.c.l.b16 %v2644
  %v2680 = vunpack.c.l.b16 %v2645
  %v2681 = vunpack.c.l.b16 %v2646
  %v2682 = vunpack.c.l.b16 %v2647
  %v2683 = vunpack.c.l.b16 %v2648
  %v2684 = vunpack.c.l.b16 %v2649
  %v2685 = vunpack.c.l.b16 %v2650
  %v2686 = vunpack.c.l.b16 %v2651
  %v2687 = vunpack.c.l.b16 %v2652
  %v2688 = vunpack.c.l.b16 %v2653
  %v2689 = vunpack.c.l.b16 %v2654
  %v2690 = vpack.c.b16 %v2675, %v2674
  %v2691 = vpack.c.b16 %v2677, %v2676
  %v2692 = vpack.c.b16 %v2679, %v2678
  %v2693 = vpack.c.b16 %v2681, %v2680
  %v2694 = vpack.c.b16 %v2683, %v2682
  %v2695 = vpack.c.b16 %v2685, %v2684
  %v2696 = vpack.c.b16 %v2687, %v2686
  %v2697 = vpack.c.b16 %v2689, %v2688
  %2706 = vmatprep.subr.bf16.mxu0 0
  %2707 = vmatpush1.bf16.msra.mxu0 %v2690
  %2708 = vmatprep.subr.bf16.mxu0 0
  %2709 = vmatpush1.bf16.msra.mxu0 %v2691
  %2710 = vmatprep.subr.bf16.mxu0 0
  %2711 = vmatpush1.bf16.msra.mxu0 %v2692
  %2712 = vmatprep.subr.bf16.mxu0 0
  %2713 = vmatpush1.bf16.msra.mxu0 %v2693
  %2714 = vmatprep.subr.bf16.mxu0 0
  %2715 = vmatpush1.bf16.msra.mxu0 %v2694
  %2716 = vmatprep.subr.bf16.mxu0 0
  %2717 = vmatpush1.bf16.msra.mxu0 %v2695
  %2718 = vmatprep.subr.bf16.mxu0 0
  %2719 = vmatpush1.bf16.msra.mxu0 %v2696
  %2720 = vmatprep.subr.bf16.mxu0 0
  %2721 = vmatpush1.bf16.msra.mxu0 %v2697
  %2722 = vmatprep.subr.bf16.mxu0 0
  %2723 = vmatpush1.bf16.msra.mxu0 0
  %2724 = vmatprep.subr.bf16.mxu0 0
  %2725 = vmatpush1.bf16.msra.mxu0 0
  %2726 = vmatprep.subr.bf16.mxu0 0
  %2727 = vmatpush1.bf16.msra.mxu0 0
  %2728 = vmatprep.subr.bf16.mxu0 0
  %2729 = vmatpush1.bf16.msra.mxu0 0
  %2730 = vmatprep.subr.bf16.mxu0 0
  %2731 = vmatpush1.bf16.msra.mxu0 0
  %2732 = vmatprep.subr.bf16.mxu0 0
  %2733 = vmatpush1.bf16.msra.mxu0 0
  %2734 = vmatprep.subr.bf16.mxu0 0
  %2735 = vmatpush1.bf16.msra.mxu0 0
  %2736 = vmatprep.subr.bf16.mxu0 0
  %2737 = vmatpush1.bf16.msra.mxu0 0
  %2738 = vmatprep.mubr.bf16.mxu0 0
  %2739 = vmatmul.mubr.bf16.gmra.mrb[0].mxu0 %v2656
  %v2740 = vpop.f32.mrb[0].mxu0
  %v2741 = vadd.f32 0.0, %v2740
  %v2742 = vpop.f32.mrb[0].mxu0
  %v2743 = vpop.f32.mrb[0].mxu0
  %v2744 = vpop.f32.mrb[0].mxu0
  %2745 = vdwg.mxu0
  %v2746 = vadd.f32 %v2637, %v2741
  %v2747 = vld [vmem:[%s6] sm:$0x1]
  %v2749 = vlaneseq
  %v2750 = vshrl.u32 %v2749, 7
  %v2751 = vsub.s32 0, %v2750
  %v2752 = vrot.slane %v2747, %v2751
  %v2754 = vadd.f32 %v2746, %v2752
  %v2755 = vmax.f32 %v2754, 0.0
  %v2756 = vpack.c.bf16 %v2755, %v2755
  %v2757 = vld [vmem:[%s7] sm:$0xf]
  %v2758 = vld [vmem:[%s7 + $0x4] sm:$0xf]
  %v2759 = vld [vmem:[%s7 + $0x8] sm:$0xf]
  %v2760 = vld [vmem:[%s7 + $0xc] sm:$0xf]
  %v2761 = vld [vmem:[%s7 + $0x10] sm:$0xf]
  %v2762 = vld [vmem:[%s7 + $0x14] sm:$0xf]
  %v2763 = vld [vmem:[%s7 + $0x18] sm:$0xf]
  %v2764 = vld [vmem:[%s7 + $0x1c] sm:$0xf]
  %v2765 = vld [vmem:[%s7 + $0x20] sm:$0xf]
  %v2766 = vld [vmem:[%s7 + $0x24] sm:$0xf]
  %v2767 = vld [vmem:[%s7 + $0x28] sm:$0xf]
  %v2768 = vld [vmem:[%s7 + $0x2c] sm:$0xf]
  %v2769 = vld [vmem:[%s7 + $0x30] sm:$0xf]
  %v2770 = vld [vmem:[%s7 + $0x34] sm:$0xf]
  %v2771 = vld [vmem:[%s7 + $0x38] sm:$0xf]
  %v2772 = vld [vmem:[%s7 + $0x3c] sm:$0xf]
  %v2773 = vld [vmem:[%s8] sm:$0x1]
  %v2775 = vlaneseq
  %v2776 = vshrl.u32 %v2775, 7
  %v2777 = vsub.s32 0, %v2776
  %v2778 = vrot.slane %v2773, %v2777
  %v2796 = vunpack.c.l.b16 %v2757
  %v2797 = vunpack.c.l.b16 %v2758
  %v2798 = vunpack.c.l.b16 %v2759
  %v2799 = vunpack.c.l.b16 %v2760
  %v2800 = vunpack.c.l.b16 %v2761
  %v2801 = vunpack.c.l.b16 %v2762
  %v2802 = vunpack.c.l.b16 %v2763
  %v2803 = vunpack.c.l.b16 %v2764
  %v2804 = vunpack.c.l.b16 %v2765
  %v2805 = vunpack.c.l.b16 %v2766
  %v2806 = vunpack.c.l.b16 %v2767
  %v2807 = vunpack.c.l.b16 %v2768
  %v2808 = vunpack.c.l.b16 %v2769
  %v2809 = vunpack.c.l.b16 %v2770
  %v2810 = vunpack.c.l.b16 %v2771
  %v2811 = vunpack.c.l.b16 %v2772
  %v2812 = vpack.c.b16 %v2797, %v2796
  %v2813 = vpack.c.b16 %v2799, %v2798
  %v2814 = vpack.c.b16 %v2801, %v2800
  %v2815 = vpack.c.b16 %v2803, %v2802
  %v2816 = vpack.c.b16 %v2805, %v2804
  %v2817 = vpack.c.b16 %v2807, %v2806
  %v2818 = vpack.c.b16 %v2809, %v2808
  %v2819 = vpack.c.b16 %v2811, %v2810
  %2828 = vmatprep.subr.bf16.mxu0 0
  %2829 = vmatpush1.bf16.msra.mxu0 %v2812
  %2830 = vmatprep.subr.bf16.mxu0 0
  %2831 = vmatpush1.bf16.msra.mxu0 %v2813
  %2832 = vmatprep.subr.bf16.mxu0 0
  %2833 = vmatpush1.bf16.msra.mxu0 %v2814
  %2834 = vmatprep.subr.bf16.mxu0 0
  %2835 = vmatpush1.bf16.msra.mxu0 %v2815
  %2836 = vmatprep.subr.bf16.mxu0 0
  %2837 = vmatpush1.bf16.msra.mxu0 %v2816
  %2838 = vmatprep.subr.bf16.mxu0 0
  %2839 = vmatpush1.bf16.msra.mxu0 %v2817
  %2840 = vmatprep.subr.bf16.mxu0 0
  %2841 = vmatpush1.bf16.msra.mxu0 %v2818
  %2842 = vmatprep.subr.bf16.mxu0 0
  %2843 = vmatpush1.bf16.msra.mxu0 %v2819
  %2844 = vmatprep.subr.bf16.mxu0 0
  %2845 = vmatpush1.bf16.msra.mxu0 0
  %2846 = vmatprep.subr.bf16.mxu0 0
  %2847 = vmatpush1.bf16.msra.mxu0 0
  %2848 = vmatprep.subr.bf16.mxu0 0
  %2849 = vmatpush1.bf16.msra.mxu0 0
  %2850 = vmatprep.subr.bf16.mxu0 0
  %2851 = vmatpush1.bf16.msra.mxu0 0
  %2852 = vmatprep.subr.bf16.mxu0 0
  %2853 = vmatpush1.bf16.msra.mxu0 0
  %2854 = vmatprep.subr.bf16.mxu0 0
  %2855 = vmatpush1.bf16.msra.mxu0 0
  %2856 = vmatprep.subr.bf16.mxu0 0
  %2857 = vmatpush1.bf16.msra.mxu0 0
  %2858 = vmatprep.subr.bf16.mxu0 0
  %2859 = vmatpush1.bf16.msra.mxu0 0
  %2860 = vmatprep.mubr.bf16.mxu0 0
  %2861 = vmatmul.mubr.bf16.gmra.mrb[0].mxu0 %v2756
  %v2862 = vpop.f32.mrb[0].mxu0
  %v2863 = vadd.f32 %v2778, %v2862
  %v2864 = vpop.f32.mrb[0].mxu0
  %v2865 = vpop.f32.mrb[0].mxu0
  %v2866 = vpop.f32.mrb[0].mxu0
  %2867 = vdwg.mxu0
  %v2868 = vlaneseq
  %v2869 = vand.u32 %v2868, 127
  %vm2870 = vcmp.lt.s32.totalorder %v2869, 10
  %v2871 = vsel %vm2870, %v2863, -1e+30
  %2872 = vmax.xlane.f32.xlu0 %v2871
  %v2873 = vpop.xlane.xlu0 %2872
  %v2874 = vsub.f32 %v2871, %v2873
  %v2875 = vmul.f32 %v2874, 1.442695
  %v2876 = vpow.pop %v2875
  %2877 = vadd.xlane.f32.xlu0 %v2876
  %v2878 = vpop.xlane.xlu0 %2877
  %v2879 = vlog2.pop %v2878
  %v2880 = vmul.f32 %v2879, 0.6931472
  %v2881 = vsub.f32 %v2874, %v2880
  %2882 = vst [vmem:[%s9] sm:$0xff] %v2881
  // Predicated region
  $region38: #{net_forward.1} parent=0 // pred_check
    _
  $region39: #{net_forward.1} parent=0 // pred_check_branch
    %2884 = sbr.rel (0) target = $region41
  $region40: #{net_forward.1} parent=0 // pred_region
    _
  $region41: #{net_forward.1} parent=0 // pred_fallthru
    _
  // Predicated region
  $region42: #{net_forward.1} parent=0 // pred_check
    _
  $region43: #{net_forward.1} parent=0 // pred_check_branch
    %2886 = sbr.rel (0) target = $region45
  $region44: #{net_forward.1} parent=0 // pred_region
    _
  $region45: #{net_forward.1} parent=0 // pred_fallthru
    _

</llo_original>
